<compile_context>
chip_gen: v6e
topology: v6e:2x2x1
jax: 0.10.0
libtpu: 0.0.40
codegen_flags: <defaults>
</compile_context>

<pallas_src>
import functools

import numpy as np
import jax
import jax.numpy as jnp
from jax.experimental import pallas as pl
from jax.experimental.pallas import tpu as pltpu


# ---------------------------------------------------------------------------
# Fused kernel: conv1(+BN)+ReLU -> conv2(+BN)+ReLU -> conv3+ReLU -> GAP -> Linear
# One grid step processes NB batch elements flattened to R = NB*L rows.
# ---------------------------------------------------------------------------
def _fcn_fused_kernel(xc_ref, w1_ref, b1_ref, w2_ref, b2_ref, w3_ref, b3_ref,
                      wl_ref, bl_ref, s2_ref, s3_ref, pool_ref, o_ref):
    f32 = jnp.float32
    bf16 = jnp.bfloat16

    def conv_same_relu(act_f32, w_ref, b_ref, s_ref):
        # act_f32: (R, C) flattened (batch*length, channels) activation.
        # s_ref:   (K, R, R) block-diagonal shift operators ('same' halo gather).
        # w_ref:   (K*C, Cout) BN-folded conv weights (bf16).
        K = s_ref.shape[0]
        lpad = (K - 1) // 2
        a_bf = act_f32.astype(bf16)
        pieces = []
        for t in range(K):                      # static unroll over taps
            if t == lpad:                       # zero shift -> identity
                pieces.append(a_bf)
            else:                               # shift realized on the MXU (exact 0/1 matrix)
                shifted = jnp.dot(s_ref[t], a_bf, preferred_element_type=f32)
                pieces.append(shifted.astype(bf16))
        cols = jnp.concatenate(pieces, axis=-1)            # (R, K*C) im2col, lane-aligned
        y = jnp.dot(cols, w_ref[...], preferred_element_type=f32)  # one deep matmul
        return jnp.maximum(y + b_ref[...], 0.0)            # bias + ReLU in f32

    # Layer 1: im2col was built host-side (raw input is tiny) -> one deep matmul.
    a = jnp.dot(xc_ref[...], w1_ref[...], preferred_element_type=f32)
    a = jnp.maximum(a + b1_ref[...], 0.0)                  # (R, 128) f32

    a = conv_same_relu(a, w2_ref, b2_ref, s2_ref)          # (R, 256)
    a = conv_same_relu(a, w3_ref, b3_ref, s3_ref)          # (R, 128)

    # GAP (mean over length per batch element) as a small matmul, then Linear head.
    feat = jnp.dot(pool_ref[...], a, preferred_element_type=f32)        # (NB, 128)
    logits = jnp.dot(feat.astype(bf16), wl_ref[...],
                     preferred_element_type=f32) + bl_ref[...]          # (NB, nb_class)
    o_ref[...] = logits.astype(o_ref.dtype)


# ---------------------------------------------------------------------------
# Host-side constant operators (computed once at trace time with numpy)
# ---------------------------------------------------------------------------
def _shift_operators(nb, length, ksize):
    """(K, R, R) 0/1 matrices: S[t] @ act == act shifted by (t - lpad) rows within
    each length-block, zeros across block boundaries ('same' zero padding)."""
    lpad = (ksize - 1) // 2
    r_size = nb * length
    r = np.arange(r_size)
    pos = r % length
    mats = np.zeros((ksize, r_size, r_size), np.float32)
    for t in range(ksize):
        s = t - lpad
        valid = (pos + s >= 0) & (pos + s < length)
        rows = r[valid]
        mats[t, rows, rows + s] = 1.0
    return jnp.asarray(mats, jnp.bfloat16)


def _pool_operator(nb, length):
    """(NB, R) matrix averaging each length-block (global average pool)."""
    pool = np.zeros((nb, nb * length), np.float32)
    for n in range(nb):
        pool[n, n * length:(n + 1) * length] = 1.0 / length
    return jnp.asarray(pool, jnp.float32)


def _fold_bn(gamma, beta, mean, var, eps=1e-5):
    scale = gamma / jnp.sqrt(var + eps)
    return scale, beta - mean * scale


# ---------------------------------------------------------------------------
# Forward pass wrapper (single fused pallas_call)
# ---------------------------------------------------------------------------
def convnet_forward(p, x_ncl, *, batch_tile=8):
    """x_ncl: (N, C_in, L) float32  ->  logits (N, nb_class)."""
    N, _, L = x_ncl.shape
    x = jnp.transpose(x_ncl, (0, 2, 1)).astype(jnp.float32)   # NCL -> NLC

    K1, Cin, C1 = p["w1"].shape
    K2, _, C2 = p["w2"].shape
    K3, _, C3 = p["w3"].shape
    nb_class = p["wl"].shape[1]

    # Fold inference-mode BatchNorm into conv weights / biases (bf16 weights, f32 bias).
    s1, t1 = _fold_bn(p["g1"], p["be1"], p["m1"], p["v1"])
    s2, t2 = _fold_bn(p["g2"], p["be2"], p["m2"], p["v2"])
    w1 = (p["w1"] * s1[None, None, :]).reshape(K1 * Cin, C1).astype(jnp.bfloat16)
    b1 = (p["b1"] * s1 + t1).reshape(1, C1).astype(jnp.float32)
    w2 = (p["w2"] * s2[None, None, :]).reshape(K2 * C1, C2).astype(jnp.bfloat16)
    b2 = (p["b2"] * s2 + t2).reshape(1, C2).astype(jnp.float32)
    w3 = p["w3"].reshape(K3 * C2, C3).astype(jnp.bfloat16)
    b3 = p["b3"].reshape(1, C3).astype(jnp.float32)
    wl = p["wl"].astype(jnp.bfloat16)
    bl = p["bl"].reshape(1, nb_class).astype(jnp.float32)

    # Layer-1 im2col on the host (raw input is tiny).  PyTorch padding='same'
    # with even K pads the extra sample on the RIGHT (left=3, right=4 for K=8).
    lpad1 = (K1 - 1) // 2
    x_pad = jnp.pad(x, ((0, 0), (lpad1, (K1 - 1) - lpad1), (0, 0)))
    cols1 = jnp.concatenate([x_pad[:, t:t + L, :] for t in range(K1)], axis=-1)

    # Batch tiling: NB elements per grid step (whole batch when it is small).
    NB = N if N <= batch_tile else batch_tile
    n_steps = -(-N // NB)
    N_pad = n_steps * NB
    if N_pad != N:
        cols1 = jnp.pad(cols1, ((0, N_pad - N), (0, 0), (0, 0)))
    cols1 = cols1.reshape(N_pad * L, K1 * Cin).astype(jnp.bfloat16)

    R = NB * L
    # TODO(synk): the (K, R, R) shift operators scale quadratically in NB*L; for
    # very long sequences switch to in-kernel halo slicing instead.
    shift2 = _shift_operators(NB, L, K2)
    shift3 = _shift_operators(NB, L, K3)
    pool = _pool_operator(NB, L)

    const2 = lambda i: (0, 0)
    const3 = lambda i: (0, 0, 0)
    out = pl.pallas_call(
        _fcn_fused_kernel,
        out_shape=jax.ShapeDtypeStruct((N_pad, nb_class), jnp.float32),
        grid_spec=pltpu.PrefetchScalarGridSpec(
            num_scalar_prefetch=0,
            grid=(n_steps,),
            in_specs=[
                pl.BlockSpec((R, K1 * Cin), lambda i: (i, 0)),   # layer-1 im2col rows
                pl.BlockSpec(w1.shape, const2),
                pl.BlockSpec(b1.shape, const2),
                pl.BlockSpec(w2.shape, const2),
                pl.BlockSpec(b2.shape, const2),
                pl.BlockSpec(w3.shape, const2),
                pl.BlockSpec(b3.shape, const2),
                pl.BlockSpec(wl.shape, const2),
                pl.BlockSpec(bl.shape, const2),
                pl.BlockSpec(shift2.shape, const3),
                pl.BlockSpec(shift3.shape, const3),
                pl.BlockSpec(pool.shape, const2),
            ],
            out_specs=pl.BlockSpec((NB, nb_class), lambda i: (i, 0)),
        ),
        compiler_params=pltpu.CompilerParams(
            dimension_semantics=("parallel",),          # batch chunks are independent
            vmem_limit_bytes=32 * 1024 * 1024),
    )(cols1, w1, b1, w2, b2, w3, b3, wl, bl, shift2, shift3, pool)
    return out[:N]


# ---------------------------------------------------------------------------
# Parameters (deterministic, synthetic — no checkpoint load)
# ---------------------------------------------------------------------------
def _conv_weight(key, cout, cin, ksize):
    # PyTorch Conv1d weight is (Cout, Cin, K); we store (K, Cin, Cout).
    w = jax.random.normal(key, (cout, cin, ksize), jnp.float32)
    w = w * (1.0 / jnp.sqrt(float(cin * ksize)))
    return jnp.transpose(w, (2, 1, 0))


def init_params(key, in_channels=4, nb_class=2):
    ks = jax.random.split(key, 8)
    p = {}
    # layer1: Conv1d(in, 128, 8) + BN(128)
    p["w1"] = _conv_weight(ks[0], 128, in_channels, 8)
    p["b1"] = 0.05 * jax.random.normal(ks[1], (128,), jnp.float32)
    p["g1"], p["be1"] = jnp.ones((128,)), jnp.zeros((128,))
    p["m1"], p["v1"] = jnp.zeros((128,)), jnp.ones((128,))
    # layer2: Conv1d(128, 256, 5) + BN(256)
    p["w2"] = _conv_weight(ks[2], 256, 128, 5)
    p["b2"] = 0.05 * jax.random.normal(ks[3], (256,), jnp.float32)
    p["g2"], p["be2"] = jnp.ones((256,)), jnp.zeros((256,))
    p["m2"], p["v2"] = jnp.zeros((256,)), jnp.ones((256,))
    # layer3: Conv1dSamePadding(256, 128, 3)  (no BN)
    p["w3"] = _conv_weight(ks[4], 128, 256, 3)
    p["b3"] = 0.05 * jax.random.normal(ks[5], (128,), jnp.float32)
    # linear head
    p["wl"] = jax.random.normal(ks[6], (128, nb_class), jnp.float32) / jnp.sqrt(128.0)
    p["bl"] = 0.05 * jax.random.normal(ks[7], (nb_class,), jnp.float32)
    return p


if __name__ == "__main__":
    key = jax.random.PRNGKey(0)
    kx, kp = jax.random.split(key)
    N, C_IN, L, NB_CLASS = 2, 4, 16, 2
    x = jax.random.normal(kx, (N, C_IN, L), jnp.float32)
    params = init_params(kp, in_channels=C_IN, nb_class=NB_CLASS)

    out = jax.block_until_ready(jax.jit(convnet_forward)(params, x))
    assert out.shape == (N, NB_CLASS) and out.dtype == jnp.float32
    print("KERNEL_OK")
</pallas_src>

<mosaic_0001>
module attributes {stable_mosaic.version = 11 : i64} {
  func.func @_fcn_fused_kernel(%arg0: i32, %arg1: memref<32x32xbf16, #tpu.memory_space<vmem>>, %arg2: memref<32x128xbf16, #tpu.memory_space<vmem>>, %arg3: memref<1x128xf32, #tpu.memory_space<vmem>>, %arg4: memref<640x256xbf16, #tpu.memory_space<vmem>>, %arg5: memref<1x256xf32, #tpu.memory_space<vmem>>, %arg6: memref<768x128xbf16, #tpu.memory_space<vmem>>, %arg7: memref<1x128xf32, #tpu.memory_space<vmem>>, %arg8: memref<128x2xbf16, #tpu.memory_space<vmem>>, %arg9: memref<1x2xf32, #tpu.memory_space<vmem>>, %arg10: memref<5x32x32xbf16, #tpu.memory_space<vmem>>, %arg11: memref<3x32x32xbf16, #tpu.memory_space<vmem>>, %arg12: memref<2x32xf32, #tpu.memory_space<vmem>>, %arg13: memref<2x2xf32, #tpu.memory_space<vmem>>) attributes {dimension_semantics = [#tpu.dimension_semantics<parallel>], iteration_bounds = array<i64: 1>, scalar_prefetch = 0 : i64, scratch_operands = 0 : i64, tpu.core_type = #tpu.core_type<tc>, window_params = [{transform_indices = @transform_0, window_bounds = array<i64: 32, 32>}, {pipeline_mode = #tpu.pipeline_mode<synchronous>, transform_indices = @transform_1, window_bounds = array<i64: 32, 128>}, {pipeline_mode = #tpu.pipeline_mode<synchronous>, transform_indices = @transform_2, window_bounds = array<i64: 1, 128>}, {pipeline_mode = #tpu.pipeline_mode<synchronous>, transform_indices = @transform_3, window_bounds = array<i64: 640, 256>}, {pipeline_mode = #tpu.pipeline_mode<synchronous>, transform_indices = @transform_4, window_bounds = array<i64: 1, 256>}, {pipeline_mode = #tpu.pipeline_mode<synchronous>, transform_indices = @transform_5, window_bounds = array<i64: 768, 128>}, {pipeline_mode = #tpu.pipeline_mode<synchronous>, transform_indices = @transform_6, window_bounds = array<i64: 1, 128>}, {pipeline_mode = #tpu.pipeline_mode<synchronous>, transform_indices = @transform_7, window_bounds = array<i64: 128, 2>}, {pipeline_mode = #tpu.pipeline_mode<synchronous>, transform_indices = @transform_8, window_bounds = array<i64: 1, 2>}, {pipeline_mode = #tpu.pipeline_mode<synchronous>, transform_indices = @transform_9, window_bounds = array<i64: 5, 32, 32>}, {pipeline_mode = #tpu.pipeline_mode<synchronous>, transform_indices = @transform_10, window_bounds = array<i64: 3, 32, 32>}, {pipeline_mode = #tpu.pipeline_mode<synchronous>, transform_indices = @transform_11, window_bounds = array<i64: 2, 32>}, {transform_indices = @transform_12, window_bounds = array<i64: 2, 2>}]} {
    %c0 = arith.constant 0 : index
    %c0_0 = arith.constant 0 : index
    %0 = vector.load %arg1[%c0, %c0_0] : memref<32x32xbf16, #tpu.memory_space<vmem>>, vector<32x32xbf16>
    %c0_1 = arith.constant 0 : index
    %c0_2 = arith.constant 0 : index
    %1 = vector.load %arg2[%c0_1, %c0_2] : memref<32x128xbf16, #tpu.memory_space<vmem>>, vector<32x128xbf16>
    %cst = arith.constant dense<0.000000e+00> : vector<32x128xf32>
    %2 = tpu.matmul %0, %1, %cst {dimension_numbers = #tpu.dot_dimension_numbers<[1], [0], [0], [1], [0, 0, 1, 1], [], []>} : vector<32x32xbf16>, vector<32x128xbf16>, vector<32x128xf32> -> vector<32x128xf32>
    %c0_3 = arith.constant 0 : index
    %c0_4 = arith.constant 0 : index
    %3 = vector.load %arg3[%c0_3, %c0_4] : memref<1x128xf32, #tpu.memory_space<vmem>>, vector<1x128xf32>
    %4 = vector.broadcast %3 : vector<1x128xf32> to vector<32x128xf32>
    %5 = arith.addf %2, %4 : vector<32x128xf32>
    %cst_5 = arith.constant 0.000000e+00 : f32
    %6 = vector.broadcast %cst_5 : f32 to vector<32x128xf32>
    %7 = arith.maximumf %5, %6 : vector<32x128xf32>
    %8 = arith.truncf %7 : vector<32x128xf32> to vector<32x128xbf16>
    %c0_6 = arith.constant 0 : index
    %c0_7 = arith.constant 0 : index
    %c0_8 = arith.constant 0 : index
    %9 = vector.load %arg10[%c0_6, %c0_7, %c0_8] : memref<5x32x32xbf16, #tpu.memory_space<vmem>>, vector<1x32x32xbf16>
    %10 = vector.shape_cast %9 : vector<1x32x32xbf16> to vector<32x32xbf16>
    %cst_9 = arith.constant dense<0.000000e+00> : vector<32x128xf32>
    %11 = tpu.matmul %10, %8, %cst_9 {dimension_numbers = #tpu.dot_dimension_numbers<[1], [0], [0], [1], [0, 0, 1, 1], [], []>} : vector<32x32xbf16>, vector<32x128xbf16>, vector<32x128xf32> -> vector<32x128xf32>
    %12 = arith.truncf %11 : vector<32x128xf32> to vector<32x128xbf16>
    %c1 = arith.constant 1 : index
    %c0_10 = arith.constant 0 : index
    %c0_11 = arith.constant 0 : index
    %13 = vector.load %arg10[%c1, %c0_10, %c0_11] : memref<5x32x32xbf16, #tpu.memory_space<vmem>>, vector<1x32x32xbf16>
    %14 = vector.shape_cast %13 : vector<1x32x32xbf16> to vector<32x32xbf16>
    %cst_12 = arith.constant dense<0.000000e+00> : vector<32x128xf32>
    %15 = tpu.matmul %14, %8, %cst_12 {dimension_numbers = #tpu.dot_dimension_numbers<[1], [0], [0], [1], [0, 0, 1, 1], [], []>} : vector<32x32xbf16>, vector<32x128xbf16>, vector<32x128xf32> -> vector<32x128xf32>
    %16 = arith.truncf %15 : vector<32x128xf32> to vector<32x128xbf16>
    %c3 = arith.constant 3 : index
    %c0_13 = arith.constant 0 : index
    %c0_14 = arith.constant 0 : index
    %17 = vector.load %arg10[%c3, %c0_13, %c0_14] : memref<5x32x32xbf16, #tpu.memory_space<vmem>>, vector<1x32x32xbf16>
    %18 = vector.shape_cast %17 : vector<1x32x32xbf16> to vector<32x32xbf16>
    %cst_15 = arith.constant dense<0.000000e+00> : vector<32x128xf32>
    %19 = tpu.matmul %18, %8, %cst_15 {dimension_numbers = #tpu.dot_dimension_numbers<[1], [0], [0], [1], [0, 0, 1, 1], [], []>} : vector<32x32xbf16>, vector<32x128xbf16>, vector<32x128xf32> -> vector<32x128xf32>
    %20 = arith.truncf %19 : vector<32x128xf32> to vector<32x128xbf16>
    %c4 = arith.constant 4 : index
    %c0_16 = arith.constant 0 : index
    %c0_17 = arith.constant 0 : index
    %21 = vector.load %arg10[%c4, %c0_16, %c0_17] : memref<5x32x32xbf16, #tpu.memory_space<vmem>>, vector<1x32x32xbf16>
    %22 = vector.shape_cast %21 : vector<1x32x32xbf16> to vector<32x32xbf16>
    %cst_18 = arith.constant dense<0.000000e+00> : vector<32x128xf32>
    %23 = tpu.matmul %22, %8, %cst_18 {dimension_numbers = #tpu.dot_dimension_numbers<[1], [0], [0], [1], [0, 0, 1, 1], [], []>} : vector<32x32xbf16>, vector<32x128xbf16>, vector<32x128xf32> -> vector<32x128xf32>
    %24 = arith.truncf %23 : vector<32x128xf32> to vector<32x128xbf16>
    %25 = tpu.concatenate %12, %16, %8, %20, %24 in 1 : vector<32x128xbf16>, vector<32x128xbf16>, vector<32x128xbf16>, vector<32x128xbf16>, vector<32x128xbf16> -> vector<32x640xbf16>
    %c0_19 = arith.constant 0 : index
    %c0_20 = arith.constant 0 : index
    %26 = vector.load %arg4[%c0_19, %c0_20] : memref<640x256xbf16, #tpu.memory_space<vmem>>, vector<640x256xbf16>
    %cst_21 = arith.constant dense<0.000000e+00> : vector<32x256xf32>
    %27 = tpu.matmul %25, %26, %cst_21 {dimension_numbers = #tpu.dot_dimension_numbers<[1], [0], [0], [1], [0, 0, 1, 1], [], []>} : vector<32x640xbf16>, vector<640x256xbf16>, vector<32x256xf32> -> vector<32x256xf32>
    %c0_22 = arith.constant 0 : index
    %c0_23 = arith.constant 0 : index
    %28 = vector.load %arg5[%c0_22, %c0_23] : memref<1x256xf32, #tpu.memory_space<vmem>>, vector<1x256xf32>
    %29 = vector.broadcast %28 : vector<1x256xf32> to vector<32x256xf32>
    %30 = arith.addf %27, %29 : vector<32x256xf32>
    %cst_24 = arith.constant 0.000000e+00 : f32
    %31 = vector.broadcast %cst_24 : f32 to vector<32x256xf32>
    %32 = arith.maximumf %30, %31 : vector<32x256xf32>
    %33 = arith.truncf %32 : vector<32x256xf32> to vector<32x256xbf16>
    %c0_25 = arith.constant 0 : index
    %c0_26 = arith.constant 0 : index
    %c0_27 = arith.constant 0 : index
    %34 = vector.load %arg11[%c0_25, %c0_26, %c0_27] : memref<3x32x32xbf16, #tpu.memory_space<vmem>>, vector<1x32x32xbf16>
    %35 = vector.shape_cast %34 : vector<1x32x32xbf16> to vector<32x32xbf16>
    %cst_28 = arith.constant dense<0.000000e+00> : vector<32x256xf32>
    %36 = tpu.matmul %35, %33, %cst_28 {dimension_numbers = #tpu.dot_dimension_numbers<[1], [0], [0], [1], [0, 0, 1, 1], [], []>} : vector<32x32xbf16>, vector<32x256xbf16>, vector<32x256xf32> -> vector<32x256xf32>
    %37 = arith.truncf %36 : vector<32x256xf32> to vector<32x256xbf16>
    %c2 = arith.constant 2 : index
    %c0_29 = arith.constant 0 : index
    %c0_30 = arith.constant 0 : index
    %38 = vector.load %arg11[%c2, %c0_29, %c0_30] : memref<3x32x32xbf16, #tpu.memory_space<vmem>>, vector<1x32x32xbf16>
    %39 = vector.shape_cast %38 : vector<1x32x32xbf16> to vector<32x32xbf16>
    %cst_31 = arith.constant dense<0.000000e+00> : vector<32x256xf32>
    %40 = tpu.matmul %39, %33, %cst_31 {dimension_numbers = #tpu.dot_dimension_numbers<[1], [0], [0], [1], [0, 0, 1, 1], [], []>} : vector<32x32xbf16>, vector<32x256xbf16>, vector<32x256xf32> -> vector<32x256xf32>
    %41 = arith.truncf %40 : vector<32x256xf32> to vector<32x256xbf16>
    %42 = tpu.concatenate %37, %33, %41 in 1 : vector<32x256xbf16>, vector<32x256xbf16>, vector<32x256xbf16> -> vector<32x768xbf16>
    %c0_32 = arith.constant 0 : index
    %c0_33 = arith.constant 0 : index
    %43 = vector.load %arg6[%c0_32, %c0_33] : memref<768x128xbf16, #tpu.memory_space<vmem>>, vector<768x128xbf16>
    %cst_34 = arith.constant dense<0.000000e+00> : vector<32x128xf32>
    %44 = tpu.matmul %42, %43, %cst_34 {dimension_numbers = #tpu.dot_dimension_numbers<[1], [0], [0], [1], [0, 0, 1, 1], [], []>} : vector<32x768xbf16>, vector<768x128xbf16>, vector<32x128xf32> -> vector<32x128xf32>
    %c0_35 = arith.constant 0 : index
    %c0_36 = arith.constant 0 : index
    %45 = vector.load %arg7[%c0_35, %c0_36] : memref<1x128xf32, #tpu.memory_space<vmem>>, vector<1x128xf32>
    %46 = vector.broadcast %45 : vector<1x128xf32> to vector<32x128xf32>
    %47 = arith.addf %44, %46 : vector<32x128xf32>
    %cst_37 = arith.constant 0.000000e+00 : f32
    %48 = vector.broadcast %cst_37 : f32 to vector<32x128xf32>
    %49 = arith.maximumf %47, %48 : vector<32x128xf32>
    %c0_38 = arith.constant 0 : index
    %c0_39 = arith.constant 0 : index
    %50 = vector.load %arg12[%c0_38, %c0_39] : memref<2x32xf32, #tpu.memory_space<vmem>>, vector<2x32xf32>
    %cst_40 = arith.constant dense<0.000000e+00> : vector<2x128xf32>
    %51 = tpu.matmul %50, %49, %cst_40 {dimension_numbers = #tpu.dot_dimension_numbers<[1], [0], [0], [1], [0, 0, 1, 1], [], []>} : vector<2x32xf32>, vector<32x128xf32>, vector<2x128xf32> -> vector<2x128xf32>
    %52 = arith.truncf %51 : vector<2x128xf32> to vector<2x128xbf16>
    %c0_41 = arith.constant 0 : index
    %c0_42 = arith.constant 0 : index
    %53 = vector.load %arg8[%c0_41, %c0_42] : memref<128x2xbf16, #tpu.memory_space<vmem>>, vector<128x2xbf16>
    %cst_43 = arith.constant dense<0.000000e+00> : vector<2x2xf32>
    %54 = tpu.matmul %52, %53, %cst_43 {dimension_numbers = #tpu.dot_dimension_numbers<[1], [0], [0], [1], [0, 0, 1, 1], [], []>} : vector<2x128xbf16>, vector<128x2xbf16>, vector<2x2xf32> -> vector<2x2xf32>
    %c0_44 = arith.constant 0 : index
    %c0_45 = arith.constant 0 : index
    %55 = vector.load %arg9[%c0_44, %c0_45] : memref<1x2xf32, #tpu.memory_space<vmem>>, vector<1x2xf32>
    %56 = vector.broadcast %55 : vector<1x2xf32> to vector<2x2xf32>
    %57 = arith.addf %54, %56 : vector<2x2xf32>
    %c0_46 = arith.constant 0 : index
    %c0_47 = arith.constant 0 : index
    %58 = vector.load %arg13[%c0_46, %c0_47] : memref<2x2xf32, #tpu.memory_space<vmem>>, vector<2x2xf32>
    tpu.vector_store %arg13[%c0_46, %c0_47], %57 {strides = array<i32>} : memref<2x2xf32, #tpu.memory_space<vmem>>, vector<2x2xf32>,
    return
  }
  func.func @transform_0(%arg0: i32) -> (i32, i32) {
    %c0_i32 = arith.constant 0 : i32
    %c0_i32_0 = arith.constant 0 : i32
    return %arg0, %c0_i32 : i32, i32
  }
  func.func @transform_1(%arg0: i32) -> (i32, i32) {
    %c0_i32 = arith.constant 0 : i32
    %c0_i32_0 = arith.constant 0 : i32
    %c0_i32_1 = arith.constant 0 : i32
    return %c0_i32, %c0_i32_0 : i32, i32
  }
  func.func @transform_2(%arg0: i32) -> (i32, i32) {
    %c0_i32 = arith.constant 0 : i32
    %c0_i32_0 = arith.constant 0 : i32
    %c0_i32_1 = arith.constant 0 : i32
    return %c0_i32, %c0_i32_0 : i32, i32
  }
  func.func @transform_3(%arg0: i32) -> (i32, i32) {
    %c0_i32 = arith.constant 0 : i32
    %c0_i32_0 = arith.constant 0 : i32
    %c0_i32_1 = arith.constant 0 : i32
    return %c0_i32, %c0_i32_0 : i32, i32
  }
  func.func @transform_4(%arg0: i32) -> (i32, i32) {
    %c0_i32 = arith.constant 0 : i32
    %c0_i32_0 = arith.constant 0 : i32
    %c0_i32_1 = arith.constant 0 : i32
    return %c0_i32, %c0_i32_0 : i32, i32
  }
  func.func @transform_5(%arg0: i32) -> (i32, i32) {
    %c0_i32 = arith.constant 0 : i32
    %c0_i32_0 = arith.constant 0 : i32
    %c0_i32_1 = arith.constant 0 : i32
    return %c0_i32, %c0_i32_0 : i32, i32
  }
  func.func @transform_6(%arg0: i32) -> (i32, i32) {
    %c0_i32 = arith.constant 0 : i32
    %c0_i32_0 = arith.constant 0 : i32
    %c0_i32_1 = arith.constant 0 : i32
    return %c0_i32, %c0_i32_0 : i32, i32
  }
  func.func @transform_7(%arg0: i32) -> (i32, i32) {
    %c0_i32 = arith.constant 0 : i32
    %c0_i32_0 = arith.constant 0 : i32
    %c0_i32_1 = arith.constant 0 : i32
    return %c0_i32, %c0_i32_0 : i32, i32
  }
  func.func @transform_8(%arg0: i32) -> (i32, i32) {
    %c0_i32 = arith.constant 0 : i32
    %c0_i32_0 = arith.constant 0 : i32
    %c0_i32_1 = arith.constant 0 : i32
    return %c0_i32, %c0_i32_0 : i32, i32
  }
  func.func @transform_9(%arg0: i32) -> (i32, i32, i32) {
    %c0_i32 = arith.constant 0 : i32
    %c0_i32_0 = arith.constant 0 : i32
    %c0_i32_1 = arith.constant 0 : i32
    %c0_i32_2 = arith.constant 0 : i32
    return %c0_i32, %c0_i32_0, %c0_i32_1 : i32, i32, i32
  }
  func.func @transform_10(%arg0: i32) -> (i32, i32, i32) {
    %c0_i32 = arith.constant 0 : i32
    %c0_i32_0 = arith.constant 0 : i32
    %c0_i32_1 = arith.constant 0 : i32
    %c0_i32_2 = arith.constant 0 : i32
    return %c0_i32, %c0_i32_0, %c0_i32_1 : i32, i32, i32
  }
  func.func @transform_11(%arg0: i32) -> (i32, i32) {
    %c0_i32 = arith.constant 0 : i32
    %c0_i32_0 = arith.constant 0 : i32
    %c0_i32_1 = arith.constant 0 : i32
    return %c0_i32, %c0_i32_0 : i32, i32
  }
  func.func @transform_12(%arg0: i32) -> (i32, i32) {
    %c0_i32 = arith.constant 0 : i32
    %c0_i32_0 = arith.constant 0 : i32
    return %arg0, %c0_i32 : i32, i32
  }
}

</mosaic_0001>

<llo_original>
// kernel: convnet_forward.1
$region0: #{convnet_forward.1}
  #allocation0 [shape = 'u32[]', space=smem, size = 0x4, offset = 0x4, fixed_abs, tag = 'smem constant byte address 0x4 - core index']
  #allocation1 [shape = 'u32[144,128]{1,0:T(1,128)}', space=vmem, size = 0x12000, scoped, tag = 'internal scratch']
  %s0 = inlined_call_operand.vmem [shape: bf16[32,32], index: 0, kind: input, shape index: {}]
  %s1 = inlined_call_operand.vmem [shape: bf16[32,128], index: 1, kind: input, shape index: {}]
  %s2 = inlined_call_operand.vmem [shape: f32[1,128], index: 2, kind: input, shape index: {}]
  %s3 = inlined_call_operand.vmem [shape: bf16[640,256], index: 3, kind: input, shape index: {}]
  %s4 = inlined_call_operand.vmem [shape: f32[1,256], index: 4, kind: input, shape index: {}]
  %s5 = inlined_call_operand.vmem [shape: bf16[768,128], index: 5, kind: input, shape index: {}]
  %s6 = inlined_call_operand.vmem [shape: f32[1,128], index: 6, kind: input, shape index: {}]
  %s7 = inlined_call_operand.vmem [shape: bf16[128,2], index: 7, kind: input, shape index: {}]
  %s8 = inlined_call_operand.vmem [shape: f32[1,2], index: 8, kind: input, shape index: {}]
  %s9 = inlined_call_operand.vmem [shape: bf16[5,32,32], index: 9, kind: input, shape index: {}]
  %s10 = inlined_call_operand.vmem [shape: bf16[3,32,32], index: 10, kind: input, shape index: {}]
  %s11 = inlined_call_operand.vmem [shape: f32[2,32], index: 11, kind: input, shape index: {}]
  %s12 = inlined_call_operand.hbm [shape: f32[2,2], index: 12, kind: output, shape index: {}]
  %s13 = sld [smem:[#allocation0]]
  $region58: #{convnet_forward.1} parent=0
    _
  %s15 = ssub.s32 1, %s13
  %s16 = scalar_select 0, %s15, %s13
  $region1: #{convnet_forward.1} parent=0
    #allocation2 [shape = 'u8[1024]{0}', space=vmem, size = 0x400, scoped, tag = 'output window, operand 0, single buffered']
    #allocation3 [shape = 's32[1]{0}', space=sflag, size = 0x4, scoped, tag = 'scoped memory for convnet_forward.1']
    %17 = vsyncpa [#allocation3], 0
    // Predicated region
    $region2: #{convnet_forward.1} parent=1 // pred_check
      _
    $region3: #{convnet_forward.1} parent=1 // pred_check_branch
      %19 = sbr.rel (0) target = $region5
    $region4: #{convnet_forward.1} parent=1 // pred_region
      _
    $region5: #{convnet_forward.1} parent=1 // pred_fallthru
      _
    // Predicated region
    $region6: #{convnet_forward.1} parent=1 // pred_check
      _
    $region7: #{convnet_forward.1} parent=1 // pred_check_branch
      %21 = sbr.rel (0) target = $region9
    $region8: #{convnet_forward.1} parent=1 // pred_region
      _
    $region9: #{convnet_forward.1} parent=1 // pred_fallthru
      _
    // Predicated region
    $region10: #{convnet_forward.1} parent=1 // pred_check
      _
    $region11: #{convnet_forward.1} parent=1 // pred_check_branch
      %23 = sbr.rel (0) target = $region13
    $region12: #{convnet_forward.1} parent=1 // pred_region
      _
    $region13: #{convnet_forward.1} parent=1 // pred_fallthru
      _
    // Predicated region
    $region14: #{convnet_forward.1} parent=1 // pred_check
      _
    $region15: #{convnet_forward.1} parent=1 // pred_check_branch
      %25 = sbr.rel (0) target = $region17
    $region16: #{convnet_forward.1} parent=1 // pred_region
      _
    $region17: #{convnet_forward.1} parent=1 // pred_fallthru
      _
    // Predicated region
    $region18: #{convnet_forward.1} parent=1 // pred_check
      _
    $region19: #{convnet_forward.1} parent=1 // pred_check_branch
      %27 = sbr.rel (0) target = $region21
    $region20: #{convnet_forward.1} parent=1 // pred_region
      _
    $region21: #{convnet_forward.1} parent=1 // pred_fallthru
      _
    // Predicated region
    $region22: #{convnet_forward.1} parent=1 // pred_check
      _
    $region23: #{convnet_forward.1} parent=1 // pred_check_branch
      %29 = sbr.rel (0) target = $region25
    $region24: #{convnet_forward.1} parent=1 // pred_region
      _
    $region25: #{convnet_forward.1} parent=1 // pred_fallthru
      _
    // Predicated region
    $region26: #{convnet_forward.1} parent=1 // pred_check
      _
    $region27: #{convnet_forward.1} parent=1 // pred_check_branch
      %31 = sbr.rel (0) target = $region29
    $region28: #{convnet_forward.1} parent=1 // pred_region
      _
    $region29: #{convnet_forward.1} parent=1 // pred_fallthru
      _
    // Predicated region
    $region30: #{convnet_forward.1} parent=1 // pred_check
      _
    $region31: #{convnet_forward.1} parent=1 // pred_check_branch
      %33 = sbr.rel (0) target = $region33
    $region32: #{convnet_forward.1} parent=1 // pred_region
      _
    $region33: #{convnet_forward.1} parent=1 // pred_fallthru
      _
    // Predicated region
    $region34: #{convnet_forward.1} parent=1 // pred_check
      _
    $region35: #{convnet_forward.1} parent=1 // pred_check_branch
      %35 = sbr.rel (0) target = $region37
    $region36: #{convnet_forward.1} parent=1 // pred_region
      _
    $region37: #{convnet_forward.1} parent=1 // pred_fallthru
      _
    // Predicated region
    $region38: #{convnet_forward.1} parent=1 // pred_check
      _
    $region39: #{convnet_forward.1} parent=1 // pred_check_branch
      %37 = sbr.rel (0) target = $region41
    $region40: #{convnet_forward.1} parent=1 // pred_region
      _
    $region41: #{convnet_forward.1} parent=1 // pred_fallthru
      _
    // Predicated region
    $region42: #{convnet_forward.1} parent=1 // pred_check
      _
    $region43: #{convnet_forward.1} parent=1 // pred_check_branch
      %39 = sbr.rel (0) target = $region45
    $region44: #{convnet_forward.1} parent=1 // pred_region
      _
    $region45: #{convnet_forward.1} parent=1 // pred_fallthru
      _
    // Predicated region
    $region46: #{convnet_forward.1} parent=1 // pred_check
      _
    $region47: #{convnet_forward.1} parent=1 // pred_check_branch
      %41 = sbr.rel (0) target = $region49
    $region48: #{convnet_forward.1} parent=1 // pred_region
      _
    $region49: #{convnet_forward.1} parent=1 // pred_fallthru
      _
    %v43 = vld [vmem:[%s0] sm:$0xf]
    %v44 = vld [vmem:[%s0 + $0x4] sm:$0xf]
    %v45 = vld [vmem:[%s0 + $0x8] sm:$0xf]
    %v46 = vld [vmem:[%s0 + $0xc] sm:$0xf]
    %v47 = vld [vmem:[%s1] sm:$0xf]
    %v48 = vld [vmem:[%s1 + $0x4] sm:$0xf]
    %v49 = vld [vmem:[%s1 + $0x8] sm:$0xf]
    %v50 = vld [vmem:[%s1 + $0xc] sm:$0xf]
    %v51 = vld [vmem:[%s2] sm:$0x1]
    %v53 = vlaneseq
    %v54 = vshrl.u32 %v53, 7
    %v55 = vsub.s32 0, %v54
    %v56 = vrot.slane %v51, %v55
    %v62 = vunpack.c.l.b16 %v43
    %v63 = vunpack.c.l.b16 %v44
    %v64 = vunpack.c.l.b16 %v45
    %v65 = vunpack.c.l.b16 %v46
    %v66 = vpack.c.b16 %v63, %v62
    %v67 = vpack.c.b16 %v65, %v64
    %v72 = vunpack.c.l.b16 %v47
    %v73 = vunpack.c.l.b16 %v48
    %v74 = vunpack.c.l.b16 %v49
    %v75 = vunpack.c.l.b16 %v50
    %v76 = vpack.c.b16 %v73, %v72
    %v77 = vpack.c.b16 %v75, %v74
    %vm80 = vcmask 261120
    %v82 = vsel %vm80, %v66, 0
    %v85 = vsel %vm80, %v67, 0
    %87 = vmatprep.subr.bf16.mxu0 0
    %88 = vmatpush1.bf16.msra.mxu0 0
    %89 = vmatprep.subr.bf16.mxu0 0
    %90 = vmatpush1.bf16.msra.mxu0 0
    %91 = vmatprep.subr.bf16.mxu0 0
    %92 = vmatpush1.bf16.msra.mxu0 0
    %93 = vmatprep.subr.bf16.mxu0 0
    %94 = vmatpush1.bf16.msra.mxu0 0
    %95 = vmatprep.subr.bf16.mxu0 0
    %96 = vmatpush1.bf16.msra.mxu0 0
    %97 = vmatprep.subr.bf16.mxu0 0
    %98 = vmatpush1.bf16.msra.mxu0 0
    %99 = vmatprep.subr.bf16.mxu0 0
    %100 = vmatpush1.bf16.msra.mxu0 %v77
    %101 = vmatprep.subr.bf16.mxu0 0
    %102 = vmatpush1.bf16.msra.mxu0 %v76
    %103 = vmatprep.subr.bf16.mxu0 0
    %104 = vmatpush2.bf16.msra.mxu0 0
    %105 = vmatprep.subr.bf16.mxu0 0
    %106 = vmatpush2.bf16.msra.mxu0 0
    %107 = vmatprep.subr.bf16.mxu0 0
    %108 = vmatpush2.bf16.msra.mxu0 0
    %109 = vmatprep.subr.bf16.mxu0 0
    %110 = vmatpush2.bf16.msra.mxu0 0
    %111 = vmatprep.subr.bf16.mxu0 0
    %112 = vmatpush2.bf16.msra.mxu0 0
    %113 = vmatprep.subr.bf16.mxu0 0
    %114 = vmatpush2.bf16.msra.mxu0 0
    %115 = vmatprep.subr.bf16.mxu0 0
    %116 = vmatpush2.bf16.msra.mxu0 0
    %117 = vmatprep.subr.bf16.mxu0 0
    %118 = vmatpush2.bf16.msra.mxu0 0
    %119 = vmatprep.mubr.bf16.mxu0 0
    %120 = vmatmul.mubr.bf16.gmra.mxu0 %v82
    %v121 = vpop.f32.mrf.mxu0
    %v122 = vadd.f32 %v56, %v121
    %v123 = vpop.f32.mrf.mxu0
    %v124 = vpop.f32.mrf.mxu0
    %v125 = vadd.f32 %v56, %v124
    %v126 = vpop.f32.mrf.mxu0
    %127 = vmatprep.mubr.bf16.mxu0 0
    %128 = vmatmul.mubr.bf16.gmra.mxu0 %v85
    %v129 = vpop.f32.mrf.mxu0
    %v130 = vadd.f32 %v56, %v129
    %v131 = vpop.f32.mrf.mxu0
    %v132 = vpop.f32.mrf.mxu0
    %v133 = vadd.f32 %v56, %v132
    %v134 = vpop.f32.mrf.mxu0
    %135 = vdwg.mxu0
    %v136 = vmax.f32 %v122, 0.0
    %v137 = vmax.f32 %v125, 0.0
    %v138 = vmax.f32 %v130, 0.0
    %v139 = vmax.f32 %v133, 0.0
    %v140 = vpack.c.bf16 %v137, %v136
    %v141 = vpack.c.bf16 %v139, %v138
    %v142 = vld [vmem:[%s9] sm:$0xf]
    %v143 = vld [vmem:[%s9 + $0x4] sm:$0xf]
    %v144 = vld [vmem:[%s9 + $0x8] sm:$0xf]
    %v145 = vld [vmem:[%s9 + $0xc] sm:$0xf]
    %v150 = vunpack.c.l.b16 %v142
    %v151 = vunpack.c.l.b16 %v143
    %v152 = vunpack.c.l.b16 %v144
    %v153 = vunpack.c.l.b16 %v145
    %v154 = vpack.c.b16 %v151, %v150
    %v155 = vpack.c.b16 %v153, %v152
    %v157 = vsel %vm80, %v154, 0
    %v160 = vsel %vm80, %v155, 0
    %162 = vmatprep.subr.bf16.mxu0 0
    %163 = vmatpush1.bf16.msra.mxu0 0
    %164 = vmatprep.subr.bf16.mxu0 0
    %165 = vmatpush1.bf16.msra.mxu0 0
    %166 = vmatprep.subr.bf16.mxu0 0
    %167 = vmatpush1.bf16.msra.mxu0 0
    %168 = vmatprep.subr.bf16.mxu0 0
    %169 = vmatpush1.bf16.msra.mxu0 0
    %170 = vmatprep.subr.bf16.mxu0 0
    %171 = vmatpush1.bf16.msra.mxu0 0
    %172 = vmatprep.subr.bf16.mxu0 0
    %173 = vmatpush1.bf16.msra.mxu0 0
    %174 = vmatprep.subr.bf16.mxu0 0
    %175 = vmatpush1.bf16.msra.mxu0 %v141
    %176 = vmatprep.subr.bf16.mxu0 0
    %177 = vmatpush1.bf16.msra.mxu0 %v140
    %178 = vmatprep.subr.bf16.mxu0 0
    %179 = vmatpush2.bf16.msra.mxu0 0
    %180 = vmatprep.subr.bf16.mxu0 0
    %181 = vmatpush2.bf16.msra.mxu0 0
    %182 = vmatprep.subr.bf16.mxu0 0
    %183 = vmatpush2.bf16.msra.mxu0 0
    %184 = vmatprep.subr.bf16.mxu0 0
    %185 = vmatpush2.bf16.msra.mxu0 0
    %186 = vmatprep.subr.bf16.mxu0 0
    %187 = vmatpush2.bf16.msra.mxu0 0
    %188 = vmatprep.subr.bf16.mxu0 0
    %189 = vmatpush2.bf16.msra.mxu0 0
    %190 = vmatprep.subr.bf16.mxu0 0
    %191 = vmatpush2.bf16.msra.mxu0 0
    %192 = vmatprep.subr.bf16.mxu0 0
    %193 = vmatpush2.bf16.msra.mxu0 0
    %194 = vmatprep.mubr.bf16.mxu0 0
    %195 = vmatmul.mubr.bf16.gmra.mxu0 %v157
    %v196 = vpop.f32.mrf.mxu0
    %v197 = vadd.f32 0.0, %v196
    %v198 = vpop.f32.mrf.mxu0
    %v199 = vpop.f32.mrf.mxu0
    %v200 = vadd.f32 0.0, %v199
    %v201 = vpop.f32.mrf.mxu0
    %202 = vmatprep.mubr.bf16.mxu0 0
    %203 = vmatmul.mubr.bf16.gmra.mxu0 %v160
    %v204 = vpop.f32.mrf.mxu0
    %v205 = vadd.f32 0.0, %v204
    %v206 = vpop.f32.mrf.mxu0
    %v207 = vpop.f32.mrf.mxu0
    %v208 = vadd.f32 0.0, %v207
    %v209 = vpop.f32.mrf.mxu0
    %210 = vdwg.mxu0
    %v211 = vpack.c.bf16 %v200, %v197
    %v212 = vpack.c.bf16 %v208, %v205
    %s213 = scalar_lea.vmem %s9, 16
    %v214 = vld [vmem:[%s213] sm:$0xf]
    %v215 = vld [vmem:[%s213 + $0x4] sm:$0xf]
    %v216 = vld [vmem:[%s213 + $0x8] sm:$0xf]
    %v217 = vld [vmem:[%s213 + $0xc] sm:$0xf]
    %v222 = vunpack.c.l.b16 %v214
    %v223 = vunpack.c.l.b16 %v215
    %v224 = vunpack.c.l.b16 %v216
    %v225 = vunpack.c.l.b16 %v217
    %v226 = vpack.c.b16 %v223, %v222
    %v227 = vpack.c.b16 %v225, %v224
    %v229 = vsel %vm80, %v226, 0
    %v232 = vsel %vm80, %v227, 0
    %234 = vmatprep.subr.bf16.mxu0 0
    %235 = vmatpush1.bf16.msra.mxu0 0
    %236 = vmatprep.subr.bf16.mxu0 0
    %237 = vmatpush1.bf16.msra.mxu0 0
    %238 = vmatprep.subr.bf16.mxu0 0
    %239 = vmatpush1.bf16.msra.mxu0 0
    %240 = vmatprep.subr.bf16.mxu0 0
    %241 = vmatpush1.bf16.msra.mxu0 0
    %242 = vmatprep.subr.bf16.mxu0 0
    %243 = vmatpush1.bf16.msra.mxu0 0
    %244 = vmatprep.subr.bf16.mxu0 0
    %245 = vmatpush1.bf16.msra.mxu0 0
    %246 = vmatprep.subr.bf16.mxu0 0
    %247 = vmatpush1.bf16.msra.mxu0 %v141
    %248 = vmatprep.subr.bf16.mxu0 0
    %249 = vmatpush1.bf16.msra.mxu0 %v140
    %250 = vmatprep.subr.bf16.mxu0 0
    %251 = vmatpush2.bf16.msra.mxu0 0
    %252 = vmatprep.subr.bf16.mxu0 0
    %253 = vmatpush2.bf16.msra.mxu0 0
    %254 = vmatprep.subr.bf16.mxu0 0
    %255 = vmatpush2.bf16.msra.mxu0 0
    %256 = vmatprep.subr.bf16.mxu0 0
    %257 = vmatpush2.bf16.msra.mxu0 0
    %258 = vmatprep.subr.bf16.mxu0 0
    %259 = vmatpush2.bf16.msra.mxu0 0
    %260 = vmatprep.subr.bf16.mxu0 0
    %261 = vmatpush2.bf16.msra.mxu0 0
    %262 = vmatprep.subr.bf16.mxu0 0
    %263 = vmatpush2.bf16.msra.mxu0 0
    %264 = vmatprep.subr.bf16.mxu0 0
    %265 = vmatpush2.bf16.msra.mxu0 0
    %266 = vmatprep.mubr.bf16.mxu0 0
    %267 = vmatmul.mubr.bf16.gmra.mxu0 %v229
    %v268 = vpop.f32.mrf.mxu0
    %v269 = vadd.f32 0.0, %v268
    %v270 = vpop.f32.mrf.mxu0
    %v271 = vpop.f32.mrf.mxu0
    %v272 = vadd.f32 0.0, %v271
    %v273 = vpop.f32.mrf.mxu0
    %274 = vmatprep.mubr.bf16.mxu0 0
    %275 = vmatmul.mubr.bf16.gmra.mxu0 %v232
    %v276 = vpop.f32.mrf.mxu0
    %v277 = vadd.f32 0.0, %v276
    %v278 = vpop.f32.mrf.mxu0
    %v279 = vpop.f32.mrf.mxu0
    %v280 = vadd.f32 0.0, %v279
    %v281 = vpop.f32.mrf.mxu0
    %282 = vdwg.mxu0
    %v283 = vpack.c.bf16 %v272, %v269
    %v284 = vpack.c.bf16 %v280, %v277
    %s285 = scalar_lea.vmem %s9, 48
    %v286 = vld [vmem:[%s285] sm:$0xf]
    %v287 = vld [vmem:[%s285 + $0x4] sm:$0xf]
    %v288 = vld [vmem:[%s285 + $0x8] sm:$0xf]
    %v289 = vld [vmem:[%s285 + $0xc] sm:$0xf]
    %v294 = vunpack.c.l.b16 %v286
    %v295 = vunpack.c.l.b16 %v287
    %v296 = vunpack.c.l.b16 %v288
    %v297 = vunpack.c.l.b16 %v289
    %v298 = vpack.c.b16 %v295, %v294
    %v299 = vpack.c.b16 %v297, %v296
    %v301 = vsel %vm80, %v298, 0
    %v304 = vsel %vm80, %v299, 0
    %306 = vmatprep.subr.bf16.mxu0 0
    %307 = vmatpush1.bf16.msra.mxu0 0
    %308 = vmatprep.subr.bf16.mxu0 0
    %309 = vmatpush1.bf16.msra.mxu0 0
    %310 = vmatprep.subr.bf16.mxu0 0
    %311 = vmatpush1.bf16.msra.mxu0 0
    %312 = vmatprep.subr.bf16.mxu0 0
    %313 = vmatpush1.bf16.msra.mxu0 0
    %314 = vmatprep.subr.bf16.mxu0 0
    %315 = vmatpush1.bf16.msra.mxu0 0
    %316 = vmatprep.subr.bf16.mxu0 0
    %317 = vmatpush1.bf16.msra.mxu0 0
    %318 = vmatprep.subr.bf16.mxu0 0
    %319 = vmatpush1.bf16.msra.mxu0 %v141
    %320 = vmatprep.subr.bf16.mxu0 0
    %321 = vmatpush1.bf16.msra.mxu0 %v140
    %322 = vmatprep.subr.bf16.mxu0 0
    %323 = vmatpush2.bf16.msra.mxu0 0
    %324 = vmatprep.subr.bf16.mxu0 0
    %325 = vmatpush2.bf16.msra.mxu0 0
    %326 = vmatprep.subr.bf16.mxu0 0
    %327 = vmatpush2.bf16.msra.mxu0 0
    %328 = vmatprep.subr.bf16.mxu0 0
    %329 = vmatpush2.bf16.msra.mxu0 0
    %330 = vmatprep.subr.bf16.mxu0 0
    %331 = vmatpush2.bf16.msra.mxu0 0
    %332 = vmatprep.subr.bf16.mxu0 0
    %333 = vmatpush2.bf16.msra.mxu0 0
    %334 = vmatprep.subr.bf16.mxu0 0
    %335 = vmatpush2.bf16.msra.mxu0 0
    %336 = vmatprep.subr.bf16.mxu0 0
    %337 = vmatpush2.bf16.msra.mxu0 0
    %338 = vmatprep.mubr.bf16.mxu0 0
    %339 = vmatmul.mubr.bf16.gmra.mxu0 %v301
    %v340 = vpop.f32.mrf.mxu0
    %v341 = vadd.f32 0.0, %v340
    %v342 = vpop.f32.mrf.mxu0
    %v343 = vpop.f32.mrf.mxu0
    %v344 = vadd.f32 0.0, %v343
    %v345 = vpop.f32.mrf.mxu0
    %346 = vmatprep.mubr.bf16.mxu0 0
    %347 = vmatmul.mubr.bf16.gmra.mxu0 %v304
    %v348 = vpop.f32.mrf.mxu0
    %v349 = vadd.f32 0.0, %v348
    %v350 = vpop.f32.mrf.mxu0
    %v351 = vpop.f32.mrf.mxu0
    %v352 = vadd.f32 0.0, %v351
    %v353 = vpop.f32.mrf.mxu0
    %354 = vdwg.mxu0
    %v355 = vpack.c.bf16 %v344, %v341
    %v356 = vpack.c.bf16 %v352, %v349
    %s357 = scalar_lea.vmem %s9, 64
    %v358 = vld [vmem:[%s357] sm:$0xf]
    %v359 = vld [vmem:[%s357 + $0x4] sm:$0xf]
    %v360 = vld [vmem:[%s357 + $0x8] sm:$0xf]
    %v361 = vld [vmem:[%s357 + $0xc] sm:$0xf]
    %v366 = vunpack.c.l.b16 %v358
    %v367 = vunpack.c.l.b16 %v359
    %v368 = vunpack.c.l.b16 %v360
    %v369 = vunpack.c.l.b16 %v361
    %v370 = vpack.c.b16 %v367, %v366
    %v371 = vpack.c.b16 %v369, %v368
    %v373 = vsel %vm80, %v370, 0
    %v376 = vsel %vm80, %v371, 0
    %378 = vmatprep.subr.bf16.mxu0 0
    %379 = vmatpush1.bf16.msra.mxu0 0
    %380 = vmatprep.subr.bf16.mxu0 0
    %381 = vmatpush1.bf16.msra.mxu0 0
    %382 = vmatprep.subr.bf16.mxu0 0
    %383 = vmatpush1.bf16.msra.mxu0 0
    %384 = vmatprep.subr.bf16.mxu0 0
    %385 = vmatpush1.bf16.msra.mxu0 0
    %386 = vmatprep.subr.bf16.mxu0 0
    %387 = vmatpush1.bf16.msra.mxu0 0
    %388 = vmatprep.subr.bf16.mxu0 0
    %389 = vmatpush1.bf16.msra.mxu0 0
    %390 = vmatprep.subr.bf16.mxu0 0
    %391 = vmatpush1.bf16.msra.mxu0 %v141
    %392 = vmatprep.subr.bf16.mxu0 0
    %393 = vmatpush1.bf16.msra.mxu0 %v140
    %394 = vmatprep.subr.bf16.mxu0 0
    %395 = vmatpush2.bf16.msra.mxu0 0
    %396 = vmatprep.subr.bf16.mxu0 0
    %397 = vmatpush2.bf16.msra.mxu0 0
    %398 = vmatprep.subr.bf16.mxu0 0
    %399 = vmatpush2.bf16.msra.mxu0 0
    %400 = vmatprep.subr.bf16.mxu0 0
    %401 = vmatpush2.bf16.msra.mxu0 0
    %402 = vmatprep.subr.bf16.mxu0 0
    %403 = vmatpush2.bf16.msra.mxu0 0
    %404 = vmatprep.subr.bf16.mxu0 0
    %405 = vmatpush2.bf16.msra.mxu0 0
    %406 = vmatprep.subr.bf16.mxu0 0
    %407 = vmatpush2.bf16.msra.mxu0 0
    %408 = vmatprep.subr.bf16.mxu0 0
    %409 = vmatpush2.bf16.msra.mxu0 0
    %410 = vmatprep.mubr.bf16.mxu0 0
    %411 = vmatmul.mubr.bf16.gmra.mxu0 %v373
    %v412 = vpop.f32.mrf.mxu0
    %v413 = vadd.f32 0.0, %v412
    %v414 = vpop.f32.mrf.mxu0
    %v415 = vpop.f32.mrf.mxu0
    %v416 = vadd.f32 0.0, %v415
    %v417 = vpop.f32.mrf.mxu0
    %418 = vmatprep.mubr.bf16.mxu0 0
    %419 = vmatmul.mubr.bf16.gmra.mxu0 %v376
    %v420 = vpop.f32.mrf.mxu0
    %v421 = vadd.f32 0.0, %v420
    %v422 = vpop.f32.mrf.mxu0
    %v423 = vpop.f32.mrf.mxu0
    %v424 = vadd.f32 0.0, %v423
    %v425 = vpop.f32.mrf.mxu0
    %426 = vdwg.mxu0
    %v427 = vpack.c.bf16 %v416, %v413
    %v428 = vpack.c.bf16 %v424, %v421
    %v429 = vld [vmem:[%s3] sm:$0xff]
    %v430 = vld [vmem:[%s3 + $0x8] sm:$0xff]
    %v431 = vld [vmem:[%s3 + $0x10] sm:$0xff]
    %v432 = vld [vmem:[%s3 + $0x18] sm:$0xff]
    %v433 = vld [vmem:[%s3 + $0x20] sm:$0xff]
    %v434 = vld [vmem:[%s3 + $0x28] sm:$0xff]
    %v435 = vld [vmem:[%s3 + $0x30] sm:$0xff]
    %v436 = vld [vmem:[%s3 + $0x38] sm:$0xff]
    %v437 = vld [vmem:[%s3 + $0x40] sm:$0xff]
    %v438 = vld [vmem:[%s3 + $0x48] sm:$0xff]
    %v439 = vld [vmem:[%s3 + $0x50] sm:$0xff]
    %v440 = vld [vmem:[%s3 + $0x58] sm:$0xff]
    %v441 = vld [vmem:[%s3 + $0x60] sm:$0xff]
    %v442 = vld [vmem:[%s3 + $0x68] sm:$0xff]
    %v443 = vld [vmem:[%s3 + $0x70] sm:$0xff]
    %v444 = vld [vmem:[%s3 + $0x78] sm:$0xff]
    %v445 = vld [vmem:[%s3 + $0x80] sm:$0xff]
    %v446 = vld [vmem:[%s3 + $0x88] sm:$0xff]
    %v447 = vld [vmem:[%s3 + $0x90] sm:$0xff]
    %v448 = vld [vmem:[%s3 + $0x98] sm:$0xff]
    %v449 = vld [vmem:[%s3 + $0xa0] sm:$0xff]
    %v450 = vld [vmem:[%s3 + $0xa8] sm:$0xff]
    %v451 = vld [vmem:[%s3 + $0xb0] sm:$0xff]
    %v452 = vld [vmem:[%s3 + $0xb8] sm:$0xff]
    %v453 = vld [vmem:[%s3 + $0xc0] sm:$0xff]
    %v454 = vld [vmem:[%s3 + $0xc8] sm:$0xff]
    %v455 = vld [vmem:[%s3 + $0xd0] sm:$0xff]
    %v456 = vld [vmem:[%s3 + $0xd8] sm:$0xff]
    %v457 = vld [vmem:[%s3 + $0xe0] sm:$0xff]
    %v458 = vld [vmem:[%s3 + $0xe8] sm:$0xff]
    %v459 = vld [vmem:[%s3 + $0xf0] sm:$0xff]
    %v460 = vld [vmem:[%s3 + $0xf8] sm:$0xff]
    %v461 = vld [vmem:[%s3 + $0x100] sm:$0xff]
    %v462 = vld [vmem:[%s3 + $0x108] sm:$0xff]
    %v463 = vld [vmem:[%s3 + $0x110] sm:$0xff]
    %v464 = vld [vmem:[%s3 + $0x118] sm:$0xff]
    %v465 = vld [vmem:[%s3 + $0x120] sm:$0xff]
    %v466 = vld [vmem:[%s3 + $0x128] sm:$0xff]
    %v467 = vld [vmem:[%s3 + $0x130] sm:$0xff]
    %v468 = vld [vmem:[%s3 + $0x138] sm:$0xff]
    %v469 = vld [vmem:[%s3 + $0x140] sm:$0xff]
    %v470 = vld [vmem:[%s3 + $0x148] sm:$0xff]
    %v471 = vld [vmem:[%s3 + $0x150] sm:$0xff]
    %v472 = vld [vmem:[%s3 + $0x158] sm:$0xff]
    %v473 = vld [vmem:[%s3 + $0x160] sm:$0xff]
    %v474 = vld [vmem:[%s3 + $0x168] sm:$0xff]
    %v475 = vld [vmem:[%s3 + $0x170] sm:$0xff]
    %v476 = vld [vmem:[%s3 + $0x178] sm:$0xff]
    %v477 = vld [vmem:[%s3 + $0x180] sm:$0xff]
    %v478 = vld [vmem:[%s3 + $0x188] sm:$0xff]
    %v479 = vld [vmem:[%s3 + $0x190] sm:$0xff]
    %v480 = vld [vmem:[%s3 + $0x198] sm:$0xff]
    %v481 = vld [vmem:[%s3 + $0x1a0] sm:$0xff]
    %v482 = vld [vmem:[%s3 + $0x1a8] sm:$0xff]
    %v483 = vld [vmem:[%s3 + $0x1b0] sm:$0xff]
    %v484 = vld [vmem:[%s3 + $0x1b8] sm:$0xff]
    %v485 = vld [vmem:[%s3 + $0x1c0] sm:$0xff]
    %v486 = vld [vmem:[%s3 + $0x1c8] sm:$0xff]
    %v487 = vld [vmem:[%s3 + $0x1d0] sm:$0xff]
    %v488 = vld [vmem:[%s3 + $0x1d8] sm:$0xff]
    %v489 = vld [vmem:[%s3 + $0x1e0] sm:$0xff]
    %v490 = vld [vmem:[%s3 + $0x1e8] sm:$0xff]
    %v491 = vld [vmem:[%s3 + $0x1f0] sm:$0xff]
    %v492 = vld [vmem:[%s3 + $0x1f8] sm:$0xff]
    %v493 = vld [vmem:[%s3 + $0x200] sm:$0xff]
    %v494 = vld [vmem:[%s3 + $0x208] sm:$0xff]
    %v495 = vld [vmem:[%s3 + $0x210] sm:$0xff]
    %v496 = vld [vmem:[%s3 + $0x218] sm:$0xff]
    %v497 = vld [vmem:[%s3 + $0x220] sm:$0xff]
    %v498 = vld [vmem:[%s3 + $0x228] sm:$0xff]
    %v499 = vld [vmem:[%s3 + $0x230] sm:$0xff]
    %v500 = vld [vmem:[%s3 + $0x238] sm:$0xff]
    %v501 = vld [vmem:[%s3 + $0x240] sm:$0xff]
    %v502 = vld [vmem:[%s3 + $0x248] sm:$0xff]
    %v503 = vld [vmem:[%s3 + $0x250] sm:$0xff]
    %v504 = vld [vmem:[%s3 + $0x258] sm:$0xff]
    %v505 = vld [vmem:[%s3 + $0x260] sm:$0xff]
    %v506 = vld [vmem:[%s3 + $0x268] sm:$0xff]
    %v507 = vld [vmem:[%s3 + $0x270] sm:$0xff]
    %v508 = vld [vmem:[%s3 + $0x278] sm:$0xff]
    %v509 = vld [vmem:[%s4] sm:$0x3]
    %v511 = vlaneseq
    %v512 = vshrl.u32 %v511, 7
    %v513 = vsub.s32 0, %v512
    %v514 = vrot.slane %v509, %v513
    %v515 = vlaneseq
    %v516 = vshrl.u32 %v515, 7
    %v517 = vsub.s32 1, %v516
    %v518 = vrot.slane %v509, %v517
    %v601 = vunpack.c.l.b16 %v429
    %v602 = vunpack.c.h.b16 %v429
    %v603 = vunpack.c.l.b16 %v430
    %v604 = vunpack.c.h.b16 %v430
    %v605 = vunpack.c.l.b16 %v431
    %v606 = vunpack.c.h.b16 %v431
    %v607 = vunpack.c.l.b16 %v432
    %v608 = vunpack.c.h.b16 %v432
    %v609 = vunpack.c.l.b16 %v433
    %v610 = vunpack.c.h.b16 %v433
    %v611 = vunpack.c.l.b16 %v434
    %v612 = vunpack.c.h.b16 %v434
    %v613 = vunpack.c.l.b16 %v435
    %v614 = vunpack.c.h.b16 %v435
    %v615 = vunpack.c.l.b16 %v436
    %v616 = vunpack.c.h.b16 %v436
    %v617 = vunpack.c.l.b16 %v437
    %v618 = vunpack.c.h.b16 %v437
    %v619 = vunpack.c.l.b16 %v438
    %v620 = vunpack.c.h.b16 %v438
    %v621 = vunpack.c.l.b16 %v439
    %v622 = vunpack.c.h.b16 %v439
    %v623 = vunpack.c.l.b16 %v440
    %v624 = vunpack.c.h.b16 %v440
    %v625 = vunpack.c.l.b16 %v441
    %v626 = vunpack.c.h.b16 %v441
    %v627 = vunpack.c.l.b16 %v442
    %v628 = vunpack.c.h.b16 %v442
    %v629 = vunpack.c.l.b16 %v443
    %v630 = vunpack.c.h.b16 %v443
    %v631 = vunpack.c.l.b16 %v444
    %v632 = vunpack.c.h.b16 %v444
    %v633 = vunpack.c.l.b16 %v445
    %v634 = vunpack.c.h.b16 %v445
    %v635 = vunpack.c.l.b16 %v446
    %v636 = vunpack.c.h.b16 %v446
    %v637 = vunpack.c.l.b16 %v447
    %v638 = vunpack.c.h.b16 %v447
    %v639 = vunpack.c.l.b16 %v448
    %v640 = vunpack.c.h.b16 %v448
    %v641 = vunpack.c.l.b16 %v449
    %v642 = vunpack.c.h.b16 %v449
    %v643 = vunpack.c.l.b16 %v450
    %v644 = vunpack.c.h.b16 %v450
    %v645 = vunpack.c.l.b16 %v451
    %v646 = vunpack.c.h.b16 %v451
    %v647 = vunpack.c.l.b16 %v452
    %v648 = vunpack.c.h.b16 %v452
    %v649 = vunpack.c.l.b16 %v453
    %v650 = vunpack.c.h.b16 %v453
    %v651 = vunpack.c.l.b16 %v454
    %v652 = vunpack.c.h.b16 %v454
    %v653 = vunpack.c.l.b16 %v455
    %v654 = vunpack.c.h.b16 %v455
    %v655 = vunpack.c.l.b16 %v456
    %v656 = vunpack.c.h.b16 %v456
    %v657 = vunpack.c.l.b16 %v457
    %v658 = vunpack.c.h.b16 %v457
    %v659 = vunpack.c.l.b16 %v458
    %v660 = vunpack.c.h.b16 %v458
    %v661 = vunpack.c.l.b16 %v459
    %v662 = vunpack.c.h.b16 %v459
    %v663 = vunpack.c.l.b16 %v460
    %v664 = vunpack.c.h.b16 %v460
    %v665 = vunpack.c.l.b16 %v461
    %v666 = vunpack.c.h.b16 %v461
    %v667 = vunpack.c.l.b16 %v462
    %v668 = vunpack.c.h.b16 %v462
    %v669 = vunpack.c.l.b16 %v463
    %v670 = vunpack.c.h.b16 %v463
    %v671 = vunpack.c.l.b16 %v464
    %v672 = vunpack.c.h.b16 %v464
    %v673 = vunpack.c.l.b16 %v465
    %v674 = vunpack.c.h.b16 %v465
    %v675 = vunpack.c.l.b16 %v466
    %v676 = vunpack.c.h.b16 %v466
    %v677 = vunpack.c.l.b16 %v467
    %v678 = vunpack.c.h.b16 %v467
    %v679 = vunpack.c.l.b16 %v468
    %v680 = vunpack.c.h.b16 %v468
    %v681 = vunpack.c.l.b16 %v469
    %v682 = vunpack.c.h.b16 %v469
    %v683 = vunpack.c.l.b16 %v470
    %v684 = vunpack.c.h.b16 %v470
    %v685 = vunpack.c.l.b16 %v471
    %v686 = vunpack.c.h.b16 %v471
    %v687 = vunpack.c.l.b16 %v472
    %v688 = vunpack.c.h.b16 %v472
    %v689 = vunpack.c.l.b16 %v473
    %v690 = vunpack.c.h.b16 %v473
    %v691 = vunpack.c.l.b16 %v474
    %v692 = vunpack.c.h.b16 %v474
    %v693 = vunpack.c.l.b16 %v475
    %v694 = vunpack.c.h.b16 %v475
    %v695 = vunpack.c.l.b16 %v476
    %v696 = vunpack.c.h.b16 %v476
    %v697 = vunpack.c.l.b16 %v477
    %v698 = vunpack.c.h.b16 %v477
    %v699 = vunpack.c.l.b16 %v478
    %v700 = vunpack.c.h.b16 %v478
    %v701 = vunpack.c.l.b16 %v479
    %v702 = vunpack.c.h.b16 %v479
    %v703 = vunpack.c.l.b16 %v480
    %v704 = vunpack.c.h.b16 %v480
    %v705 = vunpack.c.l.b16 %v481
    %v706 = vunpack.c.h.b16 %v481
    %v707 = vunpack.c.l.b16 %v482
    %v708 = vunpack.c.h.b16 %v482
    %v709 = vunpack.c.l.b16 %v483
    %v710 = vunpack.c.h.b16 %v483
    %v711 = vunpack.c.l.b16 %v484
    %v712 = vunpack.c.h.b16 %v484
    %v713 = vunpack.c.l.b16 %v485
    %v714 = vunpack.c.h.b16 %v485
    %v715 = vunpack.c.l.b16 %v486
    %v716 = vunpack.c.h.b16 %v486
    %v717 = vunpack.c.l.b16 %v487
    %v718 = vunpack.c.h.b16 %v487
    %v719 = vunpack.c.l.b16 %v488
    %v720 = vunpack.c.h.b16 %v488
    %v721 = vunpack.c.l.b16 %v489
    %v722 = vunpack.c.h.b16 %v489
    %v723 = vunpack.c.l.b16 %v490
    %v724 = vunpack.c.h.b16 %v490
    %v725 = vunpack.c.l.b16 %v491
    %v726 = vunpack.c.h.b16 %v491
    %v727 = vunpack.c.l.b16 %v492
    %v728 = vunpack.c.h.b16 %v492
    %v729 = vunpack.c.l.b16 %v493
    %v730 = vunpack.c.h.b16 %v493
    %v731 = vunpack.c.l.b16 %v494
    %v732 = vunpack.c.h.b16 %v494
    %v733 = vunpack.c.l.b16 %v495
    %v734 = vunpack.c.h.b16 %v495
    %v735 = vunpack.c.l.b16 %v496
    %v736 = vunpack.c.h.b16 %v496
    %v737 = vunpack.c.l.b16 %v497
    %v738 = vunpack.c.h.b16 %v497
    %v739 = vunpack.c.l.b16 %v498
    %v740 = vunpack.c.h.b16 %v498
    %v741 = vunpack.c.l.b16 %v499
    %v742 = vunpack.c.h.b16 %v499
    %v743 = vunpack.c.l.b16 %v500
    %v744 = vunpack.c.h.b16 %v500
    %v745 = vunpack.c.l.b16 %v501
    %v746 = vunpack.c.h.b16 %v501
    %v747 = vunpack.c.l.b16 %v502
    %v748 = vunpack.c.h.b16 %v502
    %v749 = vunpack.c.l.b16 %v503
    %v750 = vunpack.c.h.b16 %v503
    %v751 = vunpack.c.l.b16 %v504
    %v752 = vunpack.c.h.b16 %v504
    %v753 = vunpack.c.l.b16 %v505
    %v754 = vunpack.c.h.b16 %v505
    %v755 = vunpack.c.l.b16 %v506
    %v756 = vunpack.c.h.b16 %v506
    %v757 = vunpack.c.l.b16 %v507
    %v758 = vunpack.c.h.b16 %v507
    %v759 = vunpack.c.l.b16 %v508
    %v760 = vunpack.c.h.b16 %v508
    %v761 = vpack.c.b16 %v603, %v601
    %v762 = vpack.c.b16 %v604, %v602
    %v763 = vpack.c.b16 %v607, %v605
    %v764 = vpack.c.b16 %v608, %v606
    %v765 = vpack.c.b16 %v611, %v609
    %v766 = vpack.c.b16 %v612, %v610
    %v767 = vpack.c.b16 %v615, %v613
    %v768 = vpack.c.b16 %v616, %v614
    %v769 = vpack.c.b16 %v619, %v617
    %v770 = vpack.c.b16 %v620, %v618
    %v771 = vpack.c.b16 %v623, %v621
    %v772 = vpack.c.b16 %v624, %v622
    %v773 = vpack.c.b16 %v627, %v625
    %v774 = vpack.c.b16 %v628, %v626
    %v775 = vpack.c.b16 %v631, %v629
    %v776 = vpack.c.b16 %v632, %v630
    %v777 = vpack.c.b16 %v635, %v633
    %v778 = vpack.c.b16 %v636, %v634
    %v779 = vpack.c.b16 %v639, %v637
    %v780 = vpack.c.b16 %v640, %v638
    %v781 = vpack.c.b16 %v643, %v641
    %v782 = vpack.c.b16 %v644, %v642
    %v783 = vpack.c.b16 %v647, %v645
    %v784 = vpack.c.b16 %v648, %v646
    %v785 = vpack.c.b16 %v651, %v649
    %v786 = vpack.c.b16 %v652, %v650
    %v787 = vpack.c.b16 %v655, %v653
    %v788 = vpack.c.b16 %v656, %v654
    %v789 = vpack.c.b16 %v659, %v657
    %v790 = vpack.c.b16 %v660, %v658
    %v791 = vpack.c.b16 %v663, %v661
    %v792 = vpack.c.b16 %v664, %v662
    %v793 = vpack.c.b16 %v667, %v665
    %v794 = vpack.c.b16 %v668, %v666
    %v795 = vpack.c.b16 %v671, %v669
    %v796 = vpack.c.b16 %v672, %v670
    %v797 = vpack.c.b16 %v675, %v673
    %v798 = vpack.c.b16 %v676, %v674
    %v799 = vpack.c.b16 %v679, %v677
    %v800 = vpack.c.b16 %v680, %v678
    %v801 = vpack.c.b16 %v683, %v681
    %v802 = vpack.c.b16 %v684, %v682
    %v803 = vpack.c.b16 %v687, %v685
    %v804 = vpack.c.b16 %v688, %v686
    %v805 = vpack.c.b16 %v691, %v689
    %v806 = vpack.c.b16 %v692, %v690
    %v807 = vpack.c.b16 %v695, %v693
    %v808 = vpack.c.b16 %v696, %v694
    %v809 = vpack.c.b16 %v699, %v697
    %v810 = vpack.c.b16 %v700, %v698
    %v811 = vpack.c.b16 %v703, %v701
    %v812 = vpack.c.b16 %v704, %v702
    %v813 = vpack.c.b16 %v707, %v705
    %v814 = vpack.c.b16 %v708, %v706
    %v815 = vpack.c.b16 %v711, %v709
    %v816 = vpack.c.b16 %v712, %v710
    %v817 = vpack.c.b16 %v715, %v713
    %v818 = vpack.c.b16 %v716, %v714
    %v819 = vpack.c.b16 %v719, %v717
    %v820 = vpack.c.b16 %v720, %v718
    %v821 = vpack.c.b16 %v723, %v721
    %v822 = vpack.c.b16 %v724, %v722
    %v823 = vpack.c.b16 %v727, %v725
    %v824 = vpack.c.b16 %v728, %v726
    %v825 = vpack.c.b16 %v731, %v729
    %v826 = vpack.c.b16 %v732, %v730
    %v827 = vpack.c.b16 %v735, %v733
    %v828 = vpack.c.b16 %v736, %v734
    %v829 = vpack.c.b16 %v739, %v737
    %v830 = vpack.c.b16 %v740, %v738
    %v831 = vpack.c.b16 %v743, %v741
    %v832 = vpack.c.b16 %v744, %v742
    %v833 = vpack.c.b16 %v747, %v745
    %v834 = vpack.c.b16 %v748, %v746
    %v835 = vpack.c.b16 %v751, %v749
    %v836 = vpack.c.b16 %v752, %v750
    %v837 = vpack.c.b16 %v755, %v753
    %v838 = vpack.c.b16 %v756, %v754
    %v839 = vpack.c.b16 %v759, %v757
    %v840 = vpack.c.b16 %v760, %v758
    %921 = vmatprep.subr.bf16.mxu0 %v776
    %922 = vmatpush1.bf16.msra.mxu0 %v775
    %923 = vmatprep.subr.bf16.mxu0 %v774
    %924 = vmatpush1.bf16.msra.mxu0 %v773
    %925 = vmatprep.subr.bf16.mxu0 %v772
    %926 = vmatpush1.bf16.msra.mxu0 %v771
    %927 = vmatprep.subr.bf16.mxu0 %v770
    %928 = vmatpush1.bf16.msra.mxu0 %v769
    %929 = vmatprep.subr.bf16.mxu0 %v768
    %930 = vmatpush1.bf16.msra.mxu0 %v767
    %931 = vmatprep.subr.bf16.mxu0 %v766
    %932 = vmatpush1.bf16.msra.mxu0 %v765
    %933 = vmatprep.subr.bf16.mxu0 %v764
    %934 = vmatpush1.bf16.msra.mxu0 %v763
    %935 = vmatprep.subr.bf16.mxu0 %v762
    %936 = vmatpush1.bf16.msra.mxu0 %v761
    %937 = vmatprep.subr.bf16.mxu0 %v792
    %938 = vmatpush2.bf16.msra.mxu0 %v791
    %939 = vmatprep.subr.bf16.mxu0 %v790
    %940 = vmatpush2.bf16.msra.mxu0 %v789
    %941 = vmatprep.subr.bf16.mxu0 %v788
    %942 = vmatpush2.bf16.msra.mxu0 %v787
    %943 = vmatprep.subr.bf16.mxu0 %v786
    %944 = vmatpush2.bf16.msra.mxu0 %v785
    %945 = vmatprep.subr.bf16.mxu0 %v784
    %946 = vmatpush2.bf16.msra.mxu0 %v783
    %947 = vmatprep.subr.bf16.mxu0 %v782
    %948 = vmatpush2.bf16.msra.mxu0 %v781
    %949 = vmatprep.subr.bf16.mxu0 %v780
    %950 = vmatpush2.bf16.msra.mxu0 %v779
    %951 = vmatprep.subr.bf16.mxu0 %v778
    %952 = vmatpush2.bf16.msra.mxu0 %v777
    %953 = vmatprep.mubr.bf16.mxu0 %v283
    %954 = vmatmul.mubr.bf16.gmra.mxu0 %v211
    %v955 = vpop.f32.mrf.mxu0
    %v956 = vadd.f32 %v514, %v955
    %v957 = vpop.f32.mrf.mxu0
    %v958 = vadd.f32 %v518, %v957
    %v959 = vpop.f32.mrf.mxu0
    %v960 = vadd.f32 %v514, %v959
    %v961 = vpop.f32.mrf.mxu0
    %v962 = vadd.f32 %v518, %v961
    %963 = vmatprep.mubr.bf16.mxu0 %v284
    %964 = vmatmul.mubr.bf16.gmra.mxu0 %v212
    %v965 = vpop.f32.mrf.mxu0
    %v966 = vadd.f32 %v514, %v965
    %v967 = vpop.f32.mrf.mxu0
    %v968 = vadd.f32 %v518, %v967
    %v969 = vpop.f32.mrf.mxu0
    %v970 = vadd.f32 %v514, %v969
    %v971 = vpop.f32.mrf.mxu0
    %v972 = vadd.f32 %v518, %v971
    %973 = vdwg.mxu0
    %974 = vmatprep.subr.bf16.mxu0 %v808
    %975 = vmatpush1.bf16.msra.mxu0 %v807
    %976 = vmatprep.subr.bf16.mxu0 %v806
    %977 = vmatpush1.bf16.msra.mxu0 %v805
    %978 = vmatprep.subr.bf16.mxu0 %v804
    %979 = vmatpush1.bf16.msra.mxu0 %v803
    %980 = vmatprep.subr.bf16.mxu0 %v802
    %981 = vmatpush1.bf16.msra.mxu0 %v801
    %982 = vmatprep.subr.bf16.mxu0 %v800
    %983 = vmatpush1.bf16.msra.mxu0 %v799
    %984 = vmatprep.subr.bf16.mxu0 %v798
    %985 = vmatpush1.bf16.msra.mxu0 %v797
    %986 = vmatprep.subr.bf16.mxu0 %v796
    %987 = vmatpush1.bf16.msra.mxu0 %v795
    %988 = vmatprep.subr.bf16.mxu0 %v794
    %989 = vmatpush1.bf16.msra.mxu0 %v793
    %990 = vmatprep.subr.bf16.mxu0 %v824
    %991 = vmatpush2.bf16.msra.mxu0 %v823
    %992 = vmatprep.subr.bf16.mxu0 %v822
    %993 = vmatpush2.bf16.msra.mxu0 %v821
    %994 = vmatprep.subr.bf16.mxu0 %v820
    %995 = vmatpush2.bf16.msra.mxu0 %v819
    %996 = vmatprep.subr.bf16.mxu0 %v818
    %997 = vmatpush2.bf16.msra.mxu0 %v817
    %998 = vmatprep.subr.bf16.mxu0 %v816
    %999 = vmatpush2.bf16.msra.mxu0 %v815
    %1000 = vmatprep.subr.bf16.mxu0 %v814
    %1001 = vmatpush2.bf16.msra.mxu0 %v813
    %1002 = vmatprep.subr.bf16.mxu0 %v812
    %1003 = vmatpush2.bf16.msra.mxu0 %v811
    %1004 = vmatprep.subr.bf16.mxu0 %v810
    %1005 = vmatpush2.bf16.msra.mxu0 %v809
    %1006 = vmatprep.mubr.bf16.mxu0 %v355
    %1007 = vmatmul.mubr.bf16.gmra.mxu0 %v140
    %v1008 = vpop.f32.mrf.mxu0
    %v1009 = vadd.f32 %v956, %v1008
    %v1010 = vpop.f32.mrf.mxu0
    %v1011 = vadd.f32 %v958, %v1010
    %v1012 = vpop.f32.mrf.mxu0
    %v1013 = vadd.f32 %v960, %v1012
    %v1014 = vpop.f32.mrf.mxu0
    %v1015 = vadd.f32 %v962, %v1014
    %1016 = vmatprep.mubr.bf16.mxu0 %v356
    %1017 = vmatmul.mubr.bf16.gmra.mxu0 %v141
    %v1018 = vpop.f32.mrf.mxu0
    %v1019 = vadd.f32 %v966, %v1018
    %v1020 = vpop.f32.mrf.mxu0
    %v1021 = vadd.f32 %v968, %v1020
    %v1022 = vpop.f32.mrf.mxu0
    %v1023 = vadd.f32 %v970, %v1022
    %v1024 = vpop.f32.mrf.mxu0
    %v1025 = vadd.f32 %v972, %v1024
    %1026 = vdwg.mxu0
    %1027 = vmatprep.subr.bf16.mxu0 %v840
    %1028 = vmatpush1.bf16.msra.mxu0 %v839
    %1029 = vmatprep.subr.bf16.mxu0 %v838
    %1030 = vmatpush1.bf16.msra.mxu0 %v837
    %1031 = vmatprep.subr.bf16.mxu0 %v836
    %1032 = vmatpush1.bf16.msra.mxu0 %v835
    %1033 = vmatprep.subr.bf16.mxu0 %v834
    %1034 = vmatpush1.bf16.msra.mxu0 %v833
    %1035 = vmatprep.subr.bf16.mxu0 %v832
    %1036 = vmatpush1.bf16.msra.mxu0 %v831
    %1037 = vmatprep.subr.bf16.mxu0 %v830
    %1038 = vmatpush1.bf16.msra.mxu0 %v829
    %1039 = vmatprep.subr.bf16.mxu0 %v828
    %1040 = vmatpush1.bf16.msra.mxu0 %v827
    %1041 = vmatprep.subr.bf16.mxu0 %v826
    %1042 = vmatpush1.bf16.msra.mxu0 %v825
    %1043 = vmatprep.subr.bf16.mxu0 0
    %1044 = vmatpush2.bf16.msra.mxu0 0
    %1045 = vmatprep.subr.bf16.mxu0 0
    %1046 = vmatpush2.bf16.msra.mxu0 0
    %1047 = vmatprep.subr.bf16.mxu0 0
    %1048 = vmatpush2.bf16.msra.mxu0 0
    %1049 = vmatprep.subr.bf16.mxu0 0
    %1050 = vmatpush2.bf16.msra.mxu0 0
    %1051 = vmatprep.subr.bf16.mxu0 0
    %1052 = vmatpush2.bf16.msra.mxu0 0
    %1053 = vmatprep.subr.bf16.mxu0 0
    %1054 = vmatpush2.bf16.msra.mxu0 0
    %1055 = vmatprep.subr.bf16.mxu0 0
    %1056 = vmatpush2.bf16.msra.mxu0 0
    %1057 = vmatprep.subr.bf16.mxu0 0
    %1058 = vmatpush2.bf16.msra.mxu0 0
    %1059 = vmatprep.mubr.bf16.mxu0 0
    %1060 = vmatmul.mubr.bf16.gmra.mxu0 %v427
    %v1061 = vpop.f32.mrf.mxu0
    %v1062 = vadd.f32 %v1009, %v1061
    %v1063 = vpop.f32.mrf.mxu0
    %v1064 = vadd.f32 %v1011, %v1063
    %v1065 = vpop.f32.mrf.mxu0
    %v1066 = vadd.f32 %v1013, %v1065
    %v1067 = vpop.f32.mrf.mxu0
    %v1068 = vadd.f32 %v1015, %v1067
    %1069 = vmatprep.mubr.bf16.mxu0 0
    %1070 = vmatmul.mubr.bf16.gmra.mxu0 %v428
    %v1071 = vpop.f32.mrf.mxu0
    %v1072 = vadd.f32 %v1019, %v1071
    %v1073 = vpop.f32.mrf.mxu0
    %v1074 = vadd.f32 %v1021, %v1073
    %v1075 = vpop.f32.mrf.mxu0
    %v1076 = vadd.f32 %v1023, %v1075
    %v1077 = vpop.f32.mrf.mxu0
    %v1078 = vadd.f32 %v1025, %v1077
    %1079 = vdwg.mxu0
    %v1080 = vmax.f32 %v1062, 0.0
    %v1081 = vmax.f32 %v1064, 0.0
    %v1082 = vmax.f32 %v1066, 0.0
    %v1083 = vmax.f32 %v1068, 0.0
    %v1084 = vmax.f32 %v1072, 0.0
    %v1085 = vmax.f32 %v1074, 0.0
    %v1086 = vmax.f32 %v1076, 0.0
    %v1087 = vmax.f32 %v1078, 0.0
    %v1088 = vpack.c.bf16 %v1082, %v1080
    %v1089 = vpack.c.bf16 %v1083, %v1081
    %v1090 = vpack.c.bf16 %v1086, %v1084
    %v1091 = vpack.c.bf16 %v1087, %v1085
    %v1092 = vld [vmem:[%s10] sm:$0xf]
    %v1093 = vld [vmem:[%s10 + $0x4] sm:$0xf]
    %v1094 = vld [vmem:[%s10 + $0x8] sm:$0xf]
    %v1095 = vld [vmem:[%s10 + $0xc] sm:$0xf]
    %v1100 = vunpack.c.l.b16 %v1092
    %v1101 = vunpack.c.l.b16 %v1093
    %v1102 = vunpack.c.l.b16 %v1094
    %v1103 = vunpack.c.l.b16 %v1095
    %v1104 = vpack.c.b16 %v1101, %v1100
    %v1105 = vpack.c.b16 %v1103, %v1102
    %v1107 = vsel %vm80, %v1104, 0
    %v1110 = vsel %vm80, %v1105, 0
    %1112 = vmatprep.subr.bf16.mxu0 0
    %1113 = vmatpush1.bf16.msra.mxu0 0
    %1114 = vmatprep.subr.bf16.mxu0 0
    %1115 = vmatpush1.bf16.msra.mxu0 0
    %1116 = vmatprep.subr.bf16.mxu0 0
    %1117 = vmatpush1.bf16.msra.mxu0 0
    %1118 = vmatprep.subr.bf16.mxu0 0
    %1119 = vmatpush1.bf16.msra.mxu0 0
    %1120 = vmatprep.subr.bf16.mxu0 0
    %1121 = vmatpush1.bf16.msra.mxu0 0
    %1122 = vmatprep.subr.bf16.mxu0 0
    %1123 = vmatpush1.bf16.msra.mxu0 0
    %1124 = vmatprep.subr.bf16.mxu0 %v1091
    %1125 = vmatpush1.bf16.msra.mxu0 %v1090
    %1126 = vmatprep.subr.bf16.mxu0 %v1089
    %1127 = vmatpush1.bf16.msra.mxu0 %v1088
    %1128 = vmatprep.subr.bf16.mxu0 0
    %1129 = vmatpush2.bf16.msra.mxu0 0
    %1130 = vmatprep.subr.bf16.mxu0 0
    %1131 = vmatpush2.bf16.msra.mxu0 0
    %1132 = vmatprep.subr.bf16.mxu0 0
    %1133 = vmatpush2.bf16.msra.mxu0 0
    %1134 = vmatprep.subr.bf16.mxu0 0
    %1135 = vmatpush2.bf16.msra.mxu0 0
    %1136 = vmatprep.subr.bf16.mxu0 0
    %1137 = vmatpush2.bf16.msra.mxu0 0
    %1138 = vmatprep.subr.bf16.mxu0 0
    %1139 = vmatpush2.bf16.msra.mxu0 0
    %1140 = vmatprep.subr.bf16.mxu0 0
    %1141 = vmatpush2.bf16.msra.mxu0 0
    %1142 = vmatprep.subr.bf16.mxu0 0
    %1143 = vmatpush2.bf16.msra.mxu0 0
    %1144 = vmatprep.mubr.bf16.mxu0 0
    %1145 = vmatmul.mubr.bf16.gmra.mxu0 %v1107
    %v1146 = vpop.f32.mrf.mxu0
    %v1147 = vadd.f32 0.0, %v1146
    %v1148 = vpop.f32.mrf.mxu0
    %v1149 = vadd.f32 0.0, %v1148
    %v1150 = vpop.f32.mrf.mxu0
    %v1151 = vadd.f32 0.0, %v1150
    %v1152 = vpop.f32.mrf.mxu0
    %v1153 = vadd.f32 0.0, %v1152
    %1154 = vmatprep.mubr.bf16.mxu0 0
    %1155 = vmatmul.mubr.bf16.gmra.mxu0 %v1110
    %v1156 = vpop.f32.mrf.mxu0
    %v1157 = vadd.f32 0.0, %v1156
    %v1158 = vpop.f32.mrf.mxu0
    %v1159 = vadd.f32 0.0, %v1158
    %v1160 = vpop.f32.mrf.mxu0
    %v1161 = vadd.f32 0.0, %v1160
    %v1162 = vpop.f32.mrf.mxu0
    %v1163 = vadd.f32 0.0, %v1162
    %1164 = vdwg.mxu0
    %v1165 = vpack.c.bf16 %v1151, %v1147
    %v1166 = vpack.c.bf16 %v1153, %v1149
    %v1167 = vpack.c.bf16 %v1161, %v1157
    %v1168 = vpack.c.bf16 %v1163, %v1159
    %s1169 = scalar_lea.vmem %s10, 32
    %v1170 = vld [vmem:[%s1169] sm:$0xf]
    %v1171 = vld [vmem:[%s1169 + $0x4] sm:$0xf]
    %v1172 = vld [vmem:[%s1169 + $0x8] sm:$0xf]
    %v1173 = vld [vmem:[%s1169 + $0xc] sm:$0xf]
    %v1178 = vunpack.c.l.b16 %v1170
    %v1179 = vunpack.c.l.b16 %v1171
    %v1180 = vunpack.c.l.b16 %v1172
    %v1181 = vunpack.c.l.b16 %v1173
    %v1182 = vpack.c.b16 %v1179, %v1178
    %v1183 = vpack.c.b16 %v1181, %v1180
    %v1185 = vsel %vm80, %v1182, 0
    %v1188 = vsel %vm80, %v1183, 0
    %1190 = vmatprep.subr.bf16.mxu0 0
    %1191 = vmatpush1.bf16.msra.mxu0 0
    %1192 = vmatprep.subr.bf16.mxu0 0
    %1193 = vmatpush1.bf16.msra.mxu0 0
    %1194 = vmatprep.subr.bf16.mxu0 0
    %1195 = vmatpush1.bf16.msra.mxu0 0
    %1196 = vmatprep.subr.bf16.mxu0 0
    %1197 = vmatpush1.bf16.msra.mxu0 0
    %1198 = vmatprep.subr.bf16.mxu0 0
    %1199 = vmatpush1.bf16.msra.mxu0 0
    %1200 = vmatprep.subr.bf16.mxu0 0
    %1201 = vmatpush1.bf16.msra.mxu0 0
    %1202 = vmatprep.subr.bf16.mxu0 %v1091
    %1203 = vmatpush1.bf16.msra.mxu0 %v1090
    %1204 = vmatprep.subr.bf16.mxu0 %v1089
    %1205 = vmatpush1.bf16.msra.mxu0 %v1088
    %1206 = vmatprep.subr.bf16.mxu0 0
    %1207 = vmatpush2.bf16.msra.mxu0 0
    %1208 = vmatprep.subr.bf16.mxu0 0
    %1209 = vmatpush2.bf16.msra.mxu0 0
    %1210 = vmatprep.subr.bf16.mxu0 0
    %1211 = vmatpush2.bf16.msra.mxu0 0
    %1212 = vmatprep.subr.bf16.mxu0 0
    %1213 = vmatpush2.bf16.msra.mxu0 0
    %1214 = vmatprep.subr.bf16.mxu0 0
    %1215 = vmatpush2.bf16.msra.mxu0 0
    %1216 = vmatprep.subr.bf16.mxu0 0
    %1217 = vmatpush2.bf16.msra.mxu0 0
    %1218 = vmatprep.subr.bf16.mxu0 0
    %1219 = vmatpush2.bf16.msra.mxu0 0
    %1220 = vmatprep.subr.bf16.mxu0 0
    %1221 = vmatpush2.bf16.msra.mxu0 0
    %1222 = vmatprep.mubr.bf16.mxu0 0
    %1223 = vmatmul.mubr.bf16.gmra.mxu0 %v1185
    %v1224 = vpop.f32.mrf.mxu0
    %v1225 = vadd.f32 0.0, %v1224
    %v1226 = vpop.f32.mrf.mxu0
    %v1227 = vadd.f32 0.0, %v1226
    %v1228 = vpop.f32.mrf.mxu0
    %v1229 = vadd.f32 0.0, %v1228
    %v1230 = vpop.f32.mrf.mxu0
    %v1231 = vadd.f32 0.0, %v1230
    %1232 = vmatprep.mubr.bf16.mxu0 0
    %1233 = vmatmul.mubr.bf16.gmra.mxu0 %v1188
    %v1234 = vpop.f32.mrf.mxu0
    %v1235 = vadd.f32 0.0, %v1234
    %v1236 = vpop.f32.mrf.mxu0
    %v1237 = vadd.f32 0.0, %v1236
    %v1238 = vpop.f32.mrf.mxu0
    %v1239 = vadd.f32 0.0, %v1238
    %v1240 = vpop.f32.mrf.mxu0
    %v1241 = vadd.f32 0.0, %v1240
    %1242 = vdwg.mxu0
    %v1243 = vpack.c.bf16 %v1229, %v1225
    %v1244 = vpack.c.bf16 %v1231, %v1227
    %v1245 = vpack.c.bf16 %v1239, %v1235
    %v1246 = vpack.c.bf16 %v1241, %v1237
    %v1247 = vld [vmem:[%s5] sm:$0xf]
    %v1248 = vld [vmem:[%s5 + $0x4] sm:$0xf]
    %v1249 = vld [vmem:[%s5 + $0x8] sm:$0xf]
    %v1250 = vld [vmem:[%s5 + $0xc] sm:$0xf]
    %v1251 = vld [vmem:[%s5 + $0x10] sm:$0xf]
    %v1252 = vld [vmem:[%s5 + $0x14] sm:$0xf]
    %v1253 = vld [vmem:[%s5 + $0x18] sm:$0xf]
    %v1254 = vld [vmem:[%s5 + $0x1c] sm:$0xf]
    %v1255 = vld [vmem:[%s5 + $0x20] sm:$0xf]
    %v1256 = vld [vmem:[%s5 + $0x24] sm:$0xf]
    %v1257 = vld [vmem:[%s5 + $0x28] sm:$0xf]
    %v1258 = vld [vmem:[%s5 + $0x2c] sm:$0xf]
    %v1259 = vld [vmem:[%s5 + $0x30] sm:$0xf]
    %v1260 = vld [vmem:[%s5 + $0x34] sm:$0xf]
    %v1261 = vld [vmem:[%s5 + $0x38] sm:$0xf]
    %v1262 = vld [vmem:[%s5 + $0x3c] sm:$0xf]
    %v1263 = vld [vmem:[%s5 + $0x40] sm:$0xf]
    %v1264 = vld [vmem:[%s5 + $0x44] sm:$0xf]
    %v1265 = vld [vmem:[%s5 + $0x48] sm:$0xf]
    %v1266 = vld [vmem:[%s5 + $0x4c] sm:$0xf]
    %v1267 = vld [vmem:[%s5 + $0x50] sm:$0xf]
    %v1268 = vld [vmem:[%s5 + $0x54] sm:$0xf]
    %v1269 = vld [vmem:[%s5 + $0x58] sm:$0xf]
    %v1270 = vld [vmem:[%s5 + $0x5c] sm:$0xf]
    %v1271 = vld [vmem:[%s5 + $0x60] sm:$0xf]
    %v1272 = vld [vmem:[%s5 + $0x64] sm:$0xf]
    %v1273 = vld [vmem:[%s5 + $0x68] sm:$0xf]
    %v1274 = vld [vmem:[%s5 + $0x6c] sm:$0xf]
    %v1275 = vld [vmem:[%s5 + $0x70] sm:$0xf]
    %v1276 = vld [vmem:[%s5 + $0x74] sm:$0xf]
    %v1277 = vld [vmem:[%s5 + $0x78] sm:$0xf]
    %v1278 = vld [vmem:[%s5 + $0x7c] sm:$0xf]
    %v1279 = vld [vmem:[%s5 + $0x80] sm:$0xf]
    %v1280 = vld [vmem:[%s5 + $0x84] sm:$0xf]
    %v1281 = vld [vmem:[%s5 + $0x88] sm:$0xf]
    %v1282 = vld [vmem:[%s5 + $0x8c] sm:$0xf]
    %v1283 = vld [vmem:[%s5 + $0x90] sm:$0xf]
    %v1284 = vld [vmem:[%s5 + $0x94] sm:$0xf]
    %v1285 = vld [vmem:[%s5 + $0x98] sm:$0xf]
    %v1286 = vld [vmem:[%s5 + $0x9c] sm:$0xf]
    %v1287 = vld [vmem:[%s5 + $0xa0] sm:$0xf]
    %v1288 = vld [vmem:[%s5 + $0xa4] sm:$0xf]
    %v1289 = vld [vmem:[%s5 + $0xa8] sm:$0xf]
    %v1290 = vld [vmem:[%s5 + $0xac] sm:$0xf]
    %v1291 = vld [vmem:[%s5 + $0xb0] sm:$0xf]
    %v1292 = vld [vmem:[%s5 + $0xb4] sm:$0xf]
    %v1293 = vld [vmem:[%s5 + $0xb8] sm:$0xf]
    %v1294 = vld [vmem:[%s5 + $0xbc] sm:$0xf]
    %v1295 = vld [vmem:[%s5 + $0xc0] sm:$0xf]
    %v1296 = vld [vmem:[%s5 + $0xc4] sm:$0xf]
    %v1297 = vld [vmem:[%s5 + $0xc8] sm:$0xf]
    %v1298 = vld [vmem:[%s5 + $0xcc] sm:$0xf]
    %v1299 = vld [vmem:[%s5 + $0xd0] sm:$0xf]
    %v1300 = vld [vmem:[%s5 + $0xd4] sm:$0xf]
    %v1301 = vld [vmem:[%s5 + $0xd8] sm:$0xf]
    %v1302 = vld [vmem:[%s5 + $0xdc] sm:$0xf]
    %v1303 = vld [vmem:[%s5 + $0xe0] sm:$0xf]
    %v1304 = vld [vmem:[%s5 + $0xe4] sm:$0xf]
    %v1305 = vld [vmem:[%s5 + $0xe8] sm:$0xf]
    %v1306 = vld [vmem:[%s5 + $0xec] sm:$0xf]
    %v1307 = vld [vmem:[%s5 + $0xf0] sm:$0xf]
    %v1308 = vld [vmem:[%s5 + $0xf4] sm:$0xf]
    %v1309 = vld [vmem:[%s5 + $0xf8] sm:$0xf]
    %v1310 = vld [vmem:[%s5 + $0xfc] sm:$0xf]
    %v1311 = vld [vmem:[%s5 + $0x100] sm:$0xf]
    %v1312 = vld [vmem:[%s5 + $0x104] sm:$0xf]
    %v1313 = vld [vmem:[%s5 + $0x108] sm:$0xf]
    %v1314 = vld [vmem:[%s5 + $0x10c] sm:$0xf]
    %v1315 = vld [vmem:[%s5 + $0x110] sm:$0xf]
    %v1316 = vld [vmem:[%s5 + $0x114] sm:$0xf]
    %v1317 = vld [vmem:[%s5 + $0x118] sm:$0xf]
    %v1318 = vld [vmem:[%s5 + $0x11c] sm:$0xf]
    %v1319 = vld [vmem:[%s5 + $0x120] sm:$0xf]
    %v1320 = vld [vmem:[%s5 + $0x124] sm:$0xf]
    %v1321 = vld [vmem:[%s5 + $0x128] sm:$0xf]
    %v1322 = vld [vmem:[%s5 + $0x12c] sm:$0xf]
    %v1323 = vld [vmem:[%s5 + $0x130] sm:$0xf]
    %v1324 = vld [vmem:[%s5 + $0x134] sm:$0xf]
    %v1325 = vld [vmem:[%s5 + $0x138] sm:$0xf]
    %v1326 = vld [vmem:[%s5 + $0x13c] sm:$0xf]
    %v1327 = vld [vmem:[%s5 + $0x140] sm:$0xf]
    %v1328 = vld [vmem:[%s5 + $0x144] sm:$0xf]
    %v1329 = vld [vmem:[%s5 + $0x148] sm:$0xf]
    %v1330 = vld [vmem:[%s5 + $0x14c] sm:$0xf]
    %v1331 = vld [vmem:[%s5 + $0x150] sm:$0xf]
    %v1332 = vld [vmem:[%s5 + $0x154] sm:$0xf]
    %v1333 = vld [vmem:[%s5 + $0x158] sm:$0xf]
    %v1334 = vld [vmem:[%s5 + $0x15c] sm:$0xf]
    %v1335 = vld [vmem:[%s5 + $0x160] sm:$0xf]
    %v1336 = vld [vmem:[%s5 + $0x164] sm:$0xf]
    %v1337 = vld [vmem:[%s5 + $0x168] sm:$0xf]
    %v1338 = vld [vmem:[%s5 + $0x16c] sm:$0xf]
    %v1339 = vld [vmem:[%s5 + $0x170] sm:$0xf]
    %v1340 = vld [vmem:[%s5 + $0x174] sm:$0xf]
    %v1341 = vld [vmem:[%s5 + $0x178] sm:$0xf]
    %v1342 = vld [vmem:[%s5 + $0x17c] sm:$0xf]
    %v1343 = vld [vmem:[%s6] sm:$0x1]
    %v1345 = vlaneseq
    %v1346 = vshrl.u32 %v1345, 7
    %v1347 = vsub.s32 0, %v1346
    %v1348 = vrot.slane %v1343, %v1347
    %v1446 = vunpack.c.l.b16 %v1247
    %v1447 = vunpack.c.l.b16 %v1248
    %v1448 = vunpack.c.l.b16 %v1249
    %v1449 = vunpack.c.l.b16 %v1250
    %v1450 = vunpack.c.l.b16 %v1251
    %v1451 = vunpack.c.l.b16 %v1252
    %v1452 = vunpack.c.l.b16 %v1253
    %v1453 = vunpack.c.l.b16 %v1254
    %v1454 = vunpack.c.l.b16 %v1255
    %v1455 = vunpack.c.l.b16 %v1256
    %v1456 = vunpack.c.l.b16 %v1257
    %v1457 = vunpack.c.l.b16 %v1258
    %v1458 = vunpack.c.l.b16 %v1259
    %v1459 = vunpack.c.l.b16 %v1260
    %v1460 = vunpack.c.l.b16 %v1261
    %v1461 = vunpack.c.l.b16 %v1262
    %v1462 = vunpack.c.l.b16 %v1263
    %v1463 = vunpack.c.l.b16 %v1264
    %v1464 = vunpack.c.l.b16 %v1265
    %v1465 = vunpack.c.l.b16 %v1266
    %v1466 = vunpack.c.l.b16 %v1267
    %v1467 = vunpack.c.l.b16 %v1268
    %v1468 = vunpack.c.l.b16 %v1269
    %v1469 = vunpack.c.l.b16 %v1270
    %v1470 = vunpack.c.l.b16 %v1271
    %v1471 = vunpack.c.l.b16 %v1272
    %v1472 = vunpack.c.l.b16 %v1273
    %v1473 = vunpack.c.l.b16 %v1274
    %v1474 = vunpack.c.l.b16 %v1275
    %v1475 = vunpack.c.l.b16 %v1276
    %v1476 = vunpack.c.l.b16 %v1277
    %v1477 = vunpack.c.l.b16 %v1278
    %v1478 = vunpack.c.l.b16 %v1279
    %v1479 = vunpack.c.l.b16 %v1280
    %v1480 = vunpack.c.l.b16 %v1281
    %v1481 = vunpack.c.l.b16 %v1282
    %v1482 = vunpack.c.l.b16 %v1283
    %v1483 = vunpack.c.l.b16 %v1284
    %v1484 = vunpack.c.l.b16 %v1285
    %v1485 = vunpack.c.l.b16 %v1286
    %v1486 = vunpack.c.l.b16 %v1287
    %v1487 = vunpack.c.l.b16 %v1288
    %v1488 = vunpack.c.l.b16 %v1289
    %v1489 = vunpack.c.l.b16 %v1290
    %v1490 = vunpack.c.l.b16 %v1291
    %v1491 = vunpack.c.l.b16 %v1292
    %v1492 = vunpack.c.l.b16 %v1293
    %v1493 = vunpack.c.l.b16 %v1294
    %v1494 = vunpack.c.l.b16 %v1295
    %v1495 = vunpack.c.l.b16 %v1296
    %v1496 = vunpack.c.l.b16 %v1297
    %v1497 = vunpack.c.l.b16 %v1298
    %v1498 = vunpack.c.l.b16 %v1299
    %v1499 = vunpack.c.l.b16 %v1300
    %v1500 = vunpack.c.l.b16 %v1301
    %v1501 = vunpack.c.l.b16 %v1302
    %v1502 = vunpack.c.l.b16 %v1303
    %v1503 = vunpack.c.l.b16 %v1304
    %v1504 = vunpack.c.l.b16 %v1305
    %v1505 = vunpack.c.l.b16 %v1306
    %v1506 = vunpack.c.l.b16 %v1307
    %v1507 = vunpack.c.l.b16 %v1308
    %v1508 = vunpack.c.l.b16 %v1309
    %v1509 = vunpack.c.l.b16 %v1310
    %v1510 = vunpack.c.l.b16 %v1311
    %v1511 = vunpack.c.l.b16 %v1312
    %v1512 = vunpack.c.l.b16 %v1313
    %v1513 = vunpack.c.l.b16 %v1314
    %v1514 = vunpack.c.l.b16 %v1315
    %v1515 = vunpack.c.l.b16 %v1316
    %v1516 = vunpack.c.l.b16 %v1317
    %v1517 = vunpack.c.l.b16 %v1318
    %v1518 = vunpack.c.l.b16 %v1319
    %v1519 = vunpack.c.l.b16 %v1320
    %v1520 = vunpack.c.l.b16 %v1321
    %v1521 = vunpack.c.l.b16 %v1322
    %v1522 = vunpack.c.l.b16 %v1323
    %v1523 = vunpack.c.l.b16 %v1324
    %v1524 = vunpack.c.l.b16 %v1325
    %v1525 = vunpack.c.l.b16 %v1326
    %v1526 = vunpack.c.l.b16 %v1327
    %v1527 = vunpack.c.l.b16 %v1328
    %v1528 = vunpack.c.l.b16 %v1329
    %v1529 = vunpack.c.l.b16 %v1330
    %v1530 = vunpack.c.l.b16 %v1331
    %v1531 = vunpack.c.l.b16 %v1332
    %v1532 = vunpack.c.l.b16 %v1333
    %v1533 = vunpack.c.l.b16 %v1334
    %v1534 = vunpack.c.l.b16 %v1335
    %v1535 = vunpack.c.l.b16 %v1336
    %v1536 = vunpack.c.l.b16 %v1337
    %v1537 = vunpack.c.l.b16 %v1338
    %v1538 = vunpack.c.l.b16 %v1339
    %v1539 = vunpack.c.l.b16 %v1340
    %v1540 = vunpack.c.l.b16 %v1341
    %v1541 = vunpack.c.l.b16 %v1342
    %v1542 = vpack.c.b16 %v1447, %v1446
    %v1543 = vpack.c.b16 %v1449, %v1448
    %v1544 = vpack.c.b16 %v1451, %v1450
    %v1545 = vpack.c.b16 %v1453, %v1452
    %v1546 = vpack.c.b16 %v1455, %v1454
    %v1547 = vpack.c.b16 %v1457, %v1456
    %v1548 = vpack.c.b16 %v1459, %v1458
    %v1549 = vpack.c.b16 %v1461, %v1460
    %v1550 = vpack.c.b16 %v1463, %v1462
    %v1551 = vpack.c.b16 %v1465, %v1464
    %v1552 = vpack.c.b16 %v1467, %v1466
    %v1553 = vpack.c.b16 %v1469, %v1468
    %v1554 = vpack.c.b16 %v1471, %v1470
    %v1555 = vpack.c.b16 %v1473, %v1472
    %v1556 = vpack.c.b16 %v1475, %v1474
    %v1557 = vpack.c.b16 %v1477, %v1476
    %v1558 = vpack.c.b16 %v1479, %v1478
    %v1559 = vpack.c.b16 %v1481, %v1480
    %v1560 = vpack.c.b16 %v1483, %v1482
    %v1561 = vpack.c.b16 %v1485, %v1484
    %v1562 = vpack.c.b16 %v1487, %v1486
    %v1563 = vpack.c.b16 %v1489, %v1488
    %v1564 = vpack.c.b16 %v1491, %v1490
    %v1565 = vpack.c.b16 %v1493, %v1492
    %v1566 = vpack.c.b16 %v1495, %v1494
    %v1567 = vpack.c.b16 %v1497, %v1496
    %v1568 = vpack.c.b16 %v1499, %v1498
    %v1569 = vpack.c.b16 %v1501, %v1500
    %v1570 = vpack.c.b16 %v1503, %v1502
    %v1571 = vpack.c.b16 %v1505, %v1504
    %v1572 = vpack.c.b16 %v1507, %v1506
    %v1573 = vpack.c.b16 %v1509, %v1508
    %v1574 = vpack.c.b16 %v1511, %v1510
    %v1575 = vpack.c.b16 %v1513, %v1512
    %v1576 = vpack.c.b16 %v1515, %v1514
    %v1577 = vpack.c.b16 %v1517, %v1516
    %v1578 = vpack.c.b16 %v1519, %v1518
    %v1579 = vpack.c.b16 %v1521, %v1520
    %v1580 = vpack.c.b16 %v1523, %v1522
    %v1581 = vpack.c.b16 %v1525, %v1524
    %v1582 = vpack.c.b16 %v1527, %v1526
    %v1583 = vpack.c.b16 %v1529, %v1528
    %v1584 = vpack.c.b16 %v1531, %v1530
    %v1585 = vpack.c.b16 %v1533, %v1532
    %v1586 = vpack.c.b16 %v1535, %v1534
    %v1587 = vpack.c.b16 %v1537, %v1536
    %v1588 = vpack.c.b16 %v1539, %v1538
    %v1589 = vpack.c.b16 %v1541, %v1540
    %1638 = vmatprep.subr.bf16.mxu0 0
    %1639 = vmatpush1.bf16.msra.mxu0 %v1549
    %1640 = vmatprep.subr.bf16.mxu0 0
    %1641 = vmatpush1.bf16.msra.mxu0 %v1548
    %1642 = vmatprep.subr.bf16.mxu0 0
    %1643 = vmatpush1.bf16.msra.mxu0 %v1547
    %1644 = vmatprep.subr.bf16.mxu0 0
    %1645 = vmatpush1.bf16.msra.mxu0 %v1546
    %1646 = vmatprep.subr.bf16.mxu0 0
    %1647 = vmatpush1.bf16.msra.mxu0 %v1545
    %1648 = vmatprep.subr.bf16.mxu0 0
    %1649 = vmatpush1.bf16.msra.mxu0 %v1544
    %1650 = vmatprep.subr.bf16.mxu0 0
    %1651 = vmatpush1.bf16.msra.mxu0 %v1543
    %1652 = vmatprep.subr.bf16.mxu0 0
    %1653 = vmatpush1.bf16.msra.mxu0 %v1542
    %1654 = vmatprep.subr.bf16.mxu0 0
    %1655 = vmatpush2.bf16.msra.mxu0 %v1557
    %1656 = vmatprep.subr.bf16.mxu0 0
    %1657 = vmatpush2.bf16.msra.mxu0 %v1556
    %1658 = vmatprep.subr.bf16.mxu0 0
    %1659 = vmatpush2.bf16.msra.mxu0 %v1555
    %1660 = vmatprep.subr.bf16.mxu0 0
    %1661 = vmatpush2.bf16.msra.mxu0 %v1554
    %1662 = vmatprep.subr.bf16.mxu0 0
    %1663 = vmatpush2.bf16.msra.mxu0 %v1553
    %1664 = vmatprep.subr.bf16.mxu0 0
    %1665 = vmatpush2.bf16.msra.mxu0 %v1552
    %1666 = vmatprep.subr.bf16.mxu0 0
    %1667 = vmatpush2.bf16.msra.mxu0 %v1551
    %1668 = vmatprep.subr.bf16.mxu0 0
    %1669 = vmatpush2.bf16.msra.mxu0 %v1550
    %1670 = vmatprep.mubr.bf16.mxu0 %v1166
    %1671 = vmatmul.mubr.bf16.gmra.mxu0 %v1165
    %v1672 = vpop.f32.mrf.mxu0
    %v1673 = vadd.f32 %v1348, %v1672
    %v1674 = vpop.f32.mrf.mxu0
    %v1675 = vpop.f32.mrf.mxu0
    %v1676 = vadd.f32 %v1348, %v1675
    %v1677 = vpop.f32.mrf.mxu0
    %1678 = vmatprep.mubr.bf16.mxu0 %v1168
    %1679 = vmatmul.mubr.bf16.gmra.mxu0 %v1167
    %v1680 = vpop.f32.mrf.mxu0
    %v1681 = vadd.f32 %v1348, %v1680
    %v1682 = vpop.f32.mrf.mxu0
    %v1683 = vpop.f32.mrf.mxu0
    %v1684 = vadd.f32 %v1348, %v1683
    %v1685 = vpop.f32.mrf.mxu0
    %1686 = vdwg.mxu0
    %1687 = vmatprep.subr.bf16.mxu0 0
    %1688 = vmatpush1.bf16.msra.mxu0 %v1565
    %1689 = vmatprep.subr.bf16.mxu0 0
    %1690 = vmatpush1.bf16.msra.mxu0 %v1564
    %1691 = vmatprep.subr.bf16.mxu0 0
    %1692 = vmatpush1.bf16.msra.mxu0 %v1563
    %1693 = vmatprep.subr.bf16.mxu0 0
    %1694 = vmatpush1.bf16.msra.mxu0 %v1562
    %1695 = vmatprep.subr.bf16.mxu0 0
    %1696 = vmatpush1.bf16.msra.mxu0 %v1561
    %1697 = vmatprep.subr.bf16.mxu0 0
    %1698 = vmatpush1.bf16.msra.mxu0 %v1560
    %1699 = vmatprep.subr.bf16.mxu0 0
    %1700 = vmatpush1.bf16.msra.mxu0 %v1559
    %1701 = vmatprep.subr.bf16.mxu0 0
    %1702 = vmatpush1.bf16.msra.mxu0 %v1558
    %1703 = vmatprep.subr.bf16.mxu0 0
    %1704 = vmatpush2.bf16.msra.mxu0 %v1573
    %1705 = vmatprep.subr.bf16.mxu0 0
    %1706 = vmatpush2.bf16.msra.mxu0 %v1572
    %1707 = vmatprep.subr.bf16.mxu0 0
    %1708 = vmatpush2.bf16.msra.mxu0 %v1571
    %1709 = vmatprep.subr.bf16.mxu0 0
    %1710 = vmatpush2.bf16.msra.mxu0 %v1570
    %1711 = vmatprep.subr.bf16.mxu0 0
    %1712 = vmatpush2.bf16.msra.mxu0 %v1569
    %1713 = vmatprep.subr.bf16.mxu0 0
    %1714 = vmatpush2.bf16.msra.mxu0 %v1568
    %1715 = vmatprep.subr.bf16.mxu0 0
    %1716 = vmatpush2.bf16.msra.mxu0 %v1567
    %1717 = vmatprep.subr.bf16.mxu0 0
    %1718 = vmatpush2.bf16.msra.mxu0 %v1566
    %1719 = vmatprep.mubr.bf16.mxu0 %v1089
    %1720 = vmatmul.mubr.bf16.gmra.mxu0 %v1088
    %v1721 = vpop.f32.mrf.mxu0
    %v1722 = vadd.f32 %v1673, %v1721
    %v1723 = vpop.f32.mrf.mxu0
    %v1724 = vpop.f32.mrf.mxu0
    %v1725 = vadd.f32 %v1676, %v1724
    %v1726 = vpop.f32.mrf.mxu0
    %1727 = vmatprep.mubr.bf16.mxu0 %v1091
    %1728 = vmatmul.mubr.bf16.gmra.mxu0 %v1090
    %v1729 = vpop.f32.mrf.mxu0
    %v1730 = vadd.f32 %v1681, %v1729
    %v1731 = vpop.f32.mrf.mxu0
    %v1732 = vpop.f32.mrf.mxu0
    %v1733 = vadd.f32 %v1684, %v1732
    %v1734 = vpop.f32.mrf.mxu0
    %1735 = vdwg.mxu0
    %1736 = vmatprep.subr.bf16.mxu0 0
    %1737 = vmatpush1.bf16.msra.mxu0 %v1581
    %1738 = vmatprep.subr.bf16.mxu0 0
    %1739 = vmatpush1.bf16.msra.mxu0 %v1580
    %1740 = vmatprep.subr.bf16.mxu0 0
    %1741 = vmatpush1.bf16.msra.mxu0 %v1579
    %1742 = vmatprep.subr.bf16.mxu0 0
    %1743 = vmatpush1.bf16.msra.mxu0 %v1578
    %1744 = vmatprep.subr.bf16.mxu0 0
    %1745 = vmatpush1.bf16.msra.mxu0 %v1577
    %1746 = vmatprep.subr.bf16.mxu0 0
    %1747 = vmatpush1.bf16.msra.mxu0 %v1576
    %1748 = vmatprep.subr.bf16.mxu0 0
    %1749 = vmatpush1.bf16.msra.mxu0 %v1575
    %1750 = vmatprep.subr.bf16.mxu0 0
    %1751 = vmatpush1.bf16.msra.mxu0 %v1574
    %1752 = vmatprep.subr.bf16.mxu0 0
    %1753 = vmatpush2.bf16.msra.mxu0 %v1589
    %1754 = vmatprep.subr.bf16.mxu0 0
    %1755 = vmatpush2.bf16.msra.mxu0 %v1588
    %1756 = vmatprep.subr.bf16.mxu0 0
    %1757 = vmatpush2.bf16.msra.mxu0 %v1587
    %1758 = vmatprep.subr.bf16.mxu0 0
    %1759 = vmatpush2.bf16.msra.mxu0 %v1586
    %1760 = vmatprep.subr.bf16.mxu0 0
    %1761 = vmatpush2.bf16.msra.mxu0 %v1585
    %1762 = vmatprep.subr.bf16.mxu0 0
    %1763 = vmatpush2.bf16.msra.mxu0 %v1584
    %1764 = vmatprep.subr.bf16.mxu0 0
    %1765 = vmatpush2.bf16.msra.mxu0 %v1583
    %1766 = vmatprep.subr.bf16.mxu0 0
    %1767 = vmatpush2.bf16.msra.mxu0 %v1582
    %1768 = vmatprep.mubr.bf16.mxu0 %v1244
    %1769 = vmatmul.mubr.bf16.gmra.mxu0 %v1243
    %v1770 = vpop.f32.mrf.mxu0
    %v1771 = vadd.f32 %v1722, %v1770
    %v1772 = vpop.f32.mrf.mxu0
    %v1773 = vpop.f32.mrf.mxu0
    %v1774 = vadd.f32 %v1725, %v1773
    %v1775 = vpop.f32.mrf.mxu0
    %1776 = vmatprep.mubr.bf16.mxu0 %v1246
    %1777 = vmatmul.mubr.bf16.gmra.mxu0 %v1245
    %v1778 = vpop.f32.mrf.mxu0
    %v1779 = vadd.f32 %v1730, %v1778
    %v1780 = vpop.f32.mrf.mxu0
    %v1781 = vpop.f32.mrf.mxu0
    %v1782 = vadd.f32 %v1733, %v1781
    %v1783 = vpop.f32.mrf.mxu0
    %1784 = vdwg.mxu0
    %v1785 = vmax.f32 %v1771, 0.0
    %v1786 = vmax.f32 %v1774, 0.0
    %v1787 = vmax.f32 %v1779, 0.0
    %v1788 = vmax.f32 %v1782, 0.0
    %v1789 = vld [vmem:[%s11] sm:$0x3]
    %v1791 = vsel %vm80, %v1789, 0
    %1793 = vmatprep.subr.mxu0 0.0
    %1794 = vmatpush1.msra.mxu0 0.0
    %1795 = vmatprep.subr.mxu0 0.0
    %1796 = vmatpush1.msra.mxu0 0.0
    %1797 = vmatprep.subr.mxu0 0.0
    %1798 = vmatpush1.msra.mxu0 0.0
    %1799 = vmatprep.subr.mxu0 0.0
    %1800 = vmatpush1.msra.mxu0 0.0
    %1801 = vmatprep.subr.mxu0 0.0
    %1802 = vmatpush1.msra.mxu0 0.0
    %1803 = vmatprep.subr.mxu0 0.0
    %1804 = vmatpush1.msra.mxu0 0.0
    %1805 = vmatprep.subr.mxu0 0.0
    %1806 = vmatpush1.msra.mxu0 0.0
    %1807 = vmatprep.subr.mxu0 0.0
    %1808 = vmatpush1.msra.mxu0 0.0
    %1809 = vmatprep.subr.mxu0 0.0
    %1810 = vmatpush1.msra.mxu0 0.0
    %1811 = vmatprep.subr.mxu0 0.0
    %1812 = vmatpush1.msra.mxu0 0.0
    %1813 = vmatprep.subr.mxu0 0.0
    %1814 = vmatpush1.msra.mxu0 0.0
    %1815 = vmatprep.subr.mxu0 0.0
    %1816 = vmatpush1.msra.mxu0 0.0
    %1817 = vmatprep.subr.mxu0 0.0
    %1818 = vmatpush1.msra.mxu0 %v1788
    %1819 = vmatprep.subr.mxu0 0.0
    %1820 = vmatpush1.msra.mxu0 %v1787
    %1821 = vmatprep.subr.mxu0 0.0
    %1822 = vmatpush1.msra.mxu0 %v1786
    %1823 = vmatprep.subr.mxu0 0.0
    %1824 = vmatpush1.msra.mxu0 %v1785
    %1825 = vmatprep.subr.mxu0 0.0
    %1826 = vmatpush2.msra.mxu0 0.0
    %1827 = vmatprep.subr.mxu0 0.0
    %1828 = vmatpush2.msra.mxu0 0.0
    %1829 = vmatprep.subr.mxu0 0.0
    %1830 = vmatpush2.msra.mxu0 0.0
    %1831 = vmatprep.subr.mxu0 0.0
    %1832 = vmatpush2.msra.mxu0 0.0
    %1833 = vmatprep.subr.mxu0 0.0
    %1834 = vmatpush2.msra.mxu0 0.0
    %1835 = vmatprep.subr.mxu0 0.0
    %1836 = vmatpush2.msra.mxu0 0.0
    %1837 = vmatprep.subr.mxu0 0.0
    %1838 = vmatpush2.msra.mxu0 0.0
    %1839 = vmatprep.subr.mxu0 0.0
    %1840 = vmatpush2.msra.mxu0 0.0
    %1841 = vmatprep.subr.mxu0 0.0
    %1842 = vmatpush2.msra.mxu0 0.0
    %1843 = vmatprep.subr.mxu0 0.0
    %1844 = vmatpush2.msra.mxu0 0.0
    %1845 = vmatprep.subr.mxu0 0.0
    %1846 = vmatpush2.msra.mxu0 0.0
    %1847 = vmatprep.subr.mxu0 0.0
    %1848 = vmatpush2.msra.mxu0 0.0
    %1849 = vmatprep.subr.mxu0 0.0
    %1850 = vmatpush2.msra.mxu0 0.0
    %1851 = vmatprep.subr.mxu0 0.0
    %1852 = vmatpush2.msra.mxu0 0.0
    %1853 = vmatprep.subr.mxu0 0.0
    %1854 = vmatpush2.msra.mxu0 0.0
    %1855 = vmatprep.subr.mxu0 0.0
    %1856 = vmatpush2.msra.mxu0 0.0
    %1857 = vmatprep.mubr.f32.mxu0 0.0
    %1858 = vmatmul.mubr.f32.gmra.mxu0 %v1791
    %v1859 = vpop.f32.mrf.mxu0
    %v1860 = vadd.f32 0.0, %v1859
    %v1861 = vpop.f32.mrf.mxu0
    %1862 = vdwg.mxu0
    %v1863 = vpack.c.bf16 %v1860, %v1860
    %v1864 = vld [vmem:[%s7] sm:$0xf]
    %v1865 = vld [vmem:[%s7 + $0x4] sm:$0xf]
    %v1866 = vld [vmem:[%s7 + $0x8] sm:$0xf]
    %v1867 = vld [vmem:[%s7 + $0xc] sm:$0xf]
    %v1868 = vld [vmem:[%s7 + $0x10] sm:$0xf]
    %v1869 = vld [vmem:[%s7 + $0x14] sm:$0xf]
    %v1870 = vld [vmem:[%s7 + $0x18] sm:$0xf]
    %v1871 = vld [vmem:[%s7 + $0x1c] sm:$0xf]
    %v1872 = vld [vmem:[%s7 + $0x20] sm:$0xf]
    %v1873 = vld [vmem:[%s7 + $0x24] sm:$0xf]
    %v1874 = vld [vmem:[%s7 + $0x28] sm:$0xf]
    %v1875 = vld [vmem:[%s7 + $0x2c] sm:$0xf]
    %v1876 = vld [vmem:[%s7 + $0x30] sm:$0xf]
    %v1877 = vld [vmem:[%s7 + $0x34] sm:$0xf]
    %v1878 = vld [vmem:[%s7 + $0x38] sm:$0xf]
    %v1879 = vld [vmem:[%s7 + $0x3c] sm:$0xf]
    %v1880 = vld [vmem:[%s8] sm:$0x1]
    %v1882 = vlaneseq
    %v1883 = vshrl.u32 %v1882, 7
    %v1884 = vsub.s32 0, %v1883
    %v1885 = vrot.slane %v1880, %v1884
    %v1903 = vunpack.c.l.b16 %v1864
    %v1904 = vunpack.c.l.b16 %v1865
    %v1905 = vunpack.c.l.b16 %v1866
    %v1906 = vunpack.c.l.b16 %v1867
    %v1907 = vunpack.c.l.b16 %v1868
    %v1908 = vunpack.c.l.b16 %v1869
    %v1909 = vunpack.c.l.b16 %v1870
    %v1910 = vunpack.c.l.b16 %v1871
    %v1911 = vunpack.c.l.b16 %v1872
    %v1912 = vunpack.c.l.b16 %v1873
    %v1913 = vunpack.c.l.b16 %v1874
    %v1914 = vunpack.c.l.b16 %v1875
    %v1915 = vunpack.c.l.b16 %v1876
    %v1916 = vunpack.c.l.b16 %v1877
    %v1917 = vunpack.c.l.b16 %v1878
    %v1918 = vunpack.c.l.b16 %v1879
    %v1919 = vpack.c.b16 %v1904, %v1903
    %v1920 = vpack.c.b16 %v1906, %v1905
    %v1921 = vpack.c.b16 %v1908, %v1907
    %v1922 = vpack.c.b16 %v1910, %v1909
    %v1923 = vpack.c.b16 %v1912, %v1911
    %v1924 = vpack.c.b16 %v1914, %v1913
    %v1925 = vpack.c.b16 %v1916, %v1915
    %v1926 = vpack.c.b16 %v1918, %v1917
    %1935 = vmatprep.subr.bf16.mxu0 0
    %1936 = vmatpush1.bf16.msra.mxu0 %v1926
    %1937 = vmatprep.subr.bf16.mxu0 0
    %1938 = vmatpush1.bf16.msra.mxu0 %v1925
    %1939 = vmatprep.subr.bf16.mxu0 0
    %1940 = vmatpush1.bf16.msra.mxu0 %v1924
    %1941 = vmatprep.subr.bf16.mxu0 0
    %1942 = vmatpush1.bf16.msra.mxu0 %v1923
    %1943 = vmatprep.subr.bf16.mxu0 0
    %1944 = vmatpush1.bf16.msra.mxu0 %v1922
    %1945 = vmatprep.subr.bf16.mxu0 0
    %1946 = vmatpush1.bf16.msra.mxu0 %v1921
    %1947 = vmatprep.subr.bf16.mxu0 0
    %1948 = vmatpush1.bf16.msra.mxu0 %v1920
    %1949 = vmatprep.subr.bf16.mxu0 0
    %1950 = vmatpush1.bf16.msra.mxu0 %v1919
    %1951 = vmatprep.subr.bf16.mxu0 0
    %1952 = vmatpush2.bf16.msra.mxu0 0
    %1953 = vmatprep.subr.bf16.mxu0 0
    %1954 = vmatpush2.bf16.msra.mxu0 0
    %1955 = vmatprep.subr.bf16.mxu0 0
    %1956 = vmatpush2.bf16.msra.mxu0 0
    %1957 = vmatprep.subr.bf16.mxu0 0
    %1958 = vmatpush2.bf16.msra.mxu0 0
    %1959 = vmatprep.subr.bf16.mxu0 0
    %1960 = vmatpush2.bf16.msra.mxu0 0
    %1961 = vmatprep.subr.bf16.mxu0 0
    %1962 = vmatpush2.bf16.msra.mxu0 0
    %1963 = vmatprep.subr.bf16.mxu0 0
    %1964 = vmatpush2.bf16.msra.mxu0 0
    %1965 = vmatprep.subr.bf16.mxu0 0
    %1966 = vmatpush2.bf16.msra.mxu0 0
    %1967 = vmatprep.mubr.bf16.mxu0 0
    %1968 = vmatmul.mubr.bf16.gmra.mxu0 %v1863
    %v1969 = vpop.f32.mrf.mxu0
    %v1970 = vadd.f32 %v1885, %v1969
    %v1971 = vpop.f32.mrf.mxu0
    %v1972 = vpop.f32.mrf.mxu0
    %v1973 = vpop.f32.mrf.mxu0
    %1974 = vdwg.mxu0
    %vm1975 = vcmask 9216
    %1976 = vst.msk [vmem:[#allocation2] sm:$0x3] %vm1975, %v1970
    // Predicated region
    $region50: #{convnet_forward.1} parent=1 // pred_check
      _
    $region51: #{convnet_forward.1} parent=1 // pred_check_branch
      %1978 = sbr.rel (0) target = $region53
    $region52: #{convnet_forward.1} parent=1 // pred_region
      %s1980 = ssub.s32 32, 32
      %1981 = vsyncadd [#allocation3], %s1980
      %s1983 = sshll.u32 [#allocation2], 4
      %s1984 = int_to_ptr.vmem [resolvable:$true] %s1983
      %1986 = dma.vmem_to_hbm [thread:$0]  %s1984, 32, %s12, [#allocation3]
    $region53: #{convnet_forward.1} parent=1 // pred_fallthru
      _
    // Predicated region
    $region54: #{convnet_forward.1} parent=1 // pred_check
      _
    $region55: #{convnet_forward.1} parent=1 // pred_check_branch
      %1988 = sbr.rel (0) target = $region57
    $region56: #{convnet_forward.1} parent=1 // pred_region
      %1989 = dma.done [#allocation3], 32
    $region57: #{convnet_forward.1} parent=1 // pred_fallthru
      _
    %1990 = vsyncpa [#allocation3], 1

</llo_original>
